<compile_context>
chip_gen: v7x
topology: tpu7x:2x2x1
jax: 0.10.0
libtpu: 0.0.40
codegen_flags: <defaults>
</compile_context>

<pallas_src>
import math

import jax
import jax.numpy as jnp
from jax import lax
from jax.experimental import pallas as pl
from jax.experimental.pallas import tpu as pltpu
import numpy as np

# ----------------------- model hyperparameters (small) -----------------------
VOC_SIZE = 50
EMB_SIZE = 32     # E
HIDDEN = 32       # H  (lstm_hidden_size)
LINEAR_H1 = 64    # L1
F0_DIM = 4        # F
BATCH = 2         # B
SEQ = 8           # T

BP = 8                                  # batch padded to one full sublane tile
VP = ((VOC_SIZE + 7) // 8) * 8          # vocab padded to a sublane multiple (56)
H = HIDDEN

# ---- slab A (width 8H): [table_f8 | table_b8 | whh_blockdiag | fused bias] ----
OFF_TF = 0
OFF_TB = VP
OFF_WHH = 2 * VP
OFF_B8 = OFF_WHH + 2 * H
ROWS_A = ((OFF_B8 + 1 + 7) // 8) * 8

# ---- slab B (width max(2H, L1)): [h0 | c0 | W1 | b1 | W2 | b2] ----
WB = max(2 * HIDDEN, LINEAR_H1)
OFF_H0 = 0
OFF_C0 = OFF_H0 + BP
OFF_W1 = OFF_C0 + BP
OFF_B1 = OFF_W1 + 2 * H
OFF_W2 = ((OFF_B1 + 1 + 7) // 8) * 8
OFF_B2 = OFF_W2 + LINEAR_H1
ROWS_B = ((OFF_B2 + 1 + 7) // 8) * 8

# PyTorch gate order (i, f, g, o) -> fused column block (per direction):
# fused layout blocks (width H): [i_f, i_b, f_f, f_b, o_f, o_b, g_f, g_b]
_GATE_DST = {0: 0, 1: 2, 2: 6, 3: 4}   # i->0, f->2, g->6, o->4 ; backward adds +1


# ------------------------------- Pallas kernel -------------------------------
def emb_lstm_kernel(ids_ref, ga_ref, hb_ref, out_ref):
    # ids_ref : (T*BP, 2) int32  col0 = id at (t, b), col1 = id at (T-1-t, b)
    # ga_ref  : (ROWS_A, 8H)     gates slab (proj. tables, block-diag whh, bias)
    # hb_ref  : (ROWS_B, WB)     state/head slab (h0, c0, W1, b1, W2, b2)
    # out_ref : (BP, T*F)
    TBP = ids_ref.shape[0]
    T = TBP // BP
    H2, H6, H8 = 2 * H, 6 * H, 8 * H
    f32 = jnp.float32

    # ---- joint one-hot: fwd ids hit rows [0, VP), time-reversed bwd ids hit
    # rows [VP, 2VP) of the stacked, pre-projected embedding tables ----
    ids = ids_ref[...]
    iota = lax.broadcasted_iota(jnp.int32, (TBP, 2 * VP), 1)
    oh = jnp.logical_or(iota == ids[:, 0:1],
                        iota == ids[:, 1:2] + VP).astype(f32)

    # input projections for all timesteps / both directions in one matmul
    xg = (jnp.dot(oh, ga_ref[OFF_TF:OFF_TF + 2 * VP, :],
                  preferred_element_type=f32)
          + ga_ref[OFF_B8:OFF_B8 + 1, :])                     # (T*BP, 8H)

    whh = ga_ref[OFF_WHH:OFF_WHH + H2, :]                     # (2H, 8H) block-diag
    h = hb_ref[OFF_H0:OFF_H0 + BP, 0:H2]                      # (BP, 2H) = [h_f | h_b]
    c = hb_ref[OFF_C0:OFF_C0 + BP, 0:H2]                      # (BP, 2H)

    # ---- fused bidirectional recurrence: unrolled, register-carried state ----
    hs = []
    for s in range(T):                    # T small & static -> fully unrolled
        pre = xg[s * BP:(s + 1) * BP, :] + jnp.dot(h, whh,
                                                   preferred_element_type=f32)
        gio = jax.nn.sigmoid(pre[:, 0:H6])    # i|f|o blocks only (g-cols skipped)
        gg = jnp.tanh(pre[:, H6:H8])          # (BP, 2H) = [g_f | g_b]
        c = gio[:, H2:2 * H2] * c + gio[:, 0:H2] * gg
        h = gio[:, 2 * H2:3 * H2] * jnp.tanh(c)
        hs.append(h)                          # kept in registers, no VMEM stores

    # time-major hidden slab: fwd output of step t, bwd output of step T-1-t
    hn2 = jnp.concatenate(
        [jnp.concatenate([hs[t][:, 0:H], hs[T - 1 - t][:, H:H2]], axis=1)
         for t in range(T)], axis=0)                           # (T*BP, 2H)

    # ---- MLP head: Linear(2H->L1) + ReLU + Linear(L1->F) ----
    w1 = hb_ref[OFF_W1:OFF_W1 + H2, 0:LINEAR_H1]
    b1 = hb_ref[OFF_B1:OFF_B1 + 1, 0:LINEAR_H1]
    w2 = hb_ref[OFF_W2:OFF_W2 + LINEAR_H1, 0:F0_DIM]
    b2 = hb_ref[OFF_B2:OFF_B2 + 1, 0:F0_DIM]

    h1 = jnp.maximum(jnp.dot(hn2, w1, preferred_element_type=f32) + b1, 0.0)

    # second linear per timestep, lane-concatenated -> (BP, T*F) lane-dense out
    out = jnp.concatenate(
        [jnp.dot(h1[t * BP:(t + 1) * BP, :], w2, preferred_element_type=f32) + b2
         for t in range(T)], axis=1)
    out_ref[...] = out.astype(out_ref.dtype)


# ----------------------- one-time parameter repacking -------------------------
def _place_gate_cols(w_t, dir_off, Hh):
    """w_t: (K, 4H) with cols in PyTorch order [i, f, g, o] -> (K, 8H) fused."""
    K = w_t.shape[0]
    out = jnp.zeros((K, 8 * Hh), dtype=jnp.float32)
    for src, dst in _GATE_DST.items():
        out = out.at[:, (dst + dir_off) * Hh:(dst + dir_off + 1) * Hh].set(
            w_t[:, src * Hh:(src + 1) * Hh])
    return out


def _place_gate_bias(b, dir_off, Hh):
    out = jnp.zeros((8 * Hh,), dtype=jnp.float32)
    for src, dst in _GATE_DST.items():
        out = out.at[(dst + dir_off) * Hh:(dst + dir_off + 1) * Hh].set(
            b[src * Hh:(src + 1) * Hh])
    return out


def prepare_params(params):
    """Repack weights into two fused VMEM slabs. Done ONCE, outside forward."""
    Hh, L1, F, B = HIDDEN, LINEAR_H1, F0_DIM, BATCH
    emb = params["emb_weight"].astype(jnp.float32)

    # fold the embedding gather into the input projection (table @ W_ih^T)
    tf8 = emb @ _place_gate_cols(params["wih_f"].T, 0, Hh)       # (V, 8H)
    tb8 = emb @ _place_gate_cols(params["wih_b"].T, 1, Hh)       # (V, 8H)
    whh_bd = jnp.concatenate(
        [_place_gate_cols(params["whh_f"].T, 0, Hh),
         _place_gate_cols(params["whh_b"].T, 1, Hh)], axis=0)    # (2H, 8H)
    b8 = (_place_gate_bias(params["bih_f"] + params["bhh_f"], 0, Hh)
          + _place_gate_bias(params["bih_b"] + params["bhh_b"], 1, Hh))

    ga = jnp.zeros((ROWS_A, 8 * Hh), jnp.float32)
    ga = ga.at[OFF_TF:OFF_TF + VOC_SIZE].set(tf8)
    ga = ga.at[OFF_TB:OFF_TB + VOC_SIZE].set(tb8)
    ga = ga.at[OFF_WHH:OFF_WHH + 2 * Hh].set(whh_bd)
    ga = ga.at[OFF_B8].set(b8)

    hb = jnp.zeros((ROWS_B, WB), jnp.float32)
    hb = hb.at[OFF_H0:OFF_H0 + B, 0:2 * Hh].set(
        jnp.concatenate([params["h0f"], params["h0b"]], axis=1))
    hb = hb.at[OFF_C0:OFF_C0 + B, 0:2 * Hh].set(
        jnp.concatenate([params["c0f"], params["c0b"]], axis=1))
    hb = hb.at[OFF_W1:OFF_W1 + 2 * Hh, 0:L1].set(params["w1"].T)
    hb = hb.at[OFF_B1, 0:L1].set(params["b1"])
    hb = hb.at[OFF_W2:OFF_W2 + L1, 0:F].set(params["w2"].T)
    hb = hb.at[OFF_B2, 0:F].set(params["b2"])

    return {"slab_a": jax.device_put(ga), "slab_b": jax.device_put(hb)}


# --------------------------------- forward -----------------------------------
def emb_lstm_forward(sents, sent_length, prepared):
    """Matches EMB_LSTM.forward. `sent_length` is unused (the PyTorch reference
    never packs the sequence)."""
    del sent_length
    B, T = sents.shape

    # token ids, time-major, batch padded to BP sublanes; col1 is time-reversed
    ids_tm = jnp.zeros((T, BP), jnp.int32).at[:, :B].set(sents.T.astype(jnp.int32))
    ids2 = jnp.stack([ids_tm.reshape(T * BP), ids_tm[::-1].reshape(T * BP)], axis=1)

    vmem = pl.BlockSpec(memory_space=pltpu.MemorySpace.VMEM)
    out = pl.pallas_call(
        emb_lstm_kernel,
        out_shape=jax.ShapeDtypeStruct((BP, T * F0_DIM), jnp.float32),
        in_specs=[vmem, vmem, vmem],
        out_specs=vmem,
    )(ids2, prepared["slab_a"], prepared["slab_b"])

    return out[:B]                      # (B, T*F); padded rows discarded


# ------------------------- pure-JAX reference (check) -------------------------
def emb_lstm_reference(sents, params):
    B, T = sents.shape
    Hh = HIDDEN
    emb = params["emb_weight"][sents]  # (B, T, E)

    def run_dir(wih, whh, b, h0, c0, reverse):
        h, c = h0, c0
        outs = {}
        order = range(T - 1, -1, -1) if reverse else range(T)
        for t in order:
            g = emb[:, t] @ wih.T + h @ whh.T + b
            i = jax.nn.sigmoid(g[:, :Hh])
            f = jax.nn.sigmoid(g[:, Hh:2 * Hh])
            gg = jnp.tanh(g[:, 2 * Hh:3 * Hh])
            o = jax.nn.sigmoid(g[:, 3 * Hh:])
            c = f * c + i * gg
            h = o * jnp.tanh(c)
            outs[t] = h
        return jnp.stack([outs[t] for t in range(T)], axis=1)  # (B, T, H)

    hf = run_dir(params["wih_f"], params["whh_f"],
                 params["bih_f"] + params["bhh_f"],
                 params["h0f"], params["c0f"], reverse=False)
    hb = run_dir(params["wih_b"], params["whh_b"],
                 params["bih_b"] + params["bhh_b"],
                 params["h0b"], params["c0b"], reverse=True)
    hn = jnp.concatenate([hf, hb], axis=-1)                     # (B, T, 2H)
    h1 = jax.nn.relu(hn @ params["w1"].T + params["b1"])
    out = h1 @ params["w2"].T + params["b2"]
    return out.reshape(B, T * F0_DIM)


# ------------------------------ parameter init --------------------------------
def make_params(key):
    Hh, E, V, L1, F, B = HIDDEN, EMB_SIZE, VOC_SIZE, LINEAR_H1, F0_DIM, BATCH
    ks = jax.random.split(key, 20)
    bound = 1.0 / math.sqrt(Hh)
    u = lambda k, shape, lo, hi: jax.random.uniform(
        k, shape, dtype=jnp.float32, minval=lo, maxval=hi)
    return {
        # nn.Embedding then init.uniform(-0.01, 0.01)
        "emb_weight": u(ks[0], (V, E), -0.01, 0.01),
        # LSTM default init: uniform(-1/sqrt(H), 1/sqrt(H)), gate order i,f,g,o
        "wih_f": u(ks[1], (4 * Hh, E), -bound, bound),
        "whh_f": u(ks[2], (4 * Hh, Hh), -bound, bound),
        "bih_f": u(ks[3], (4 * Hh,), -bound, bound),
        "bhh_f": u(ks[4], (4 * Hh,), -bound, bound),
        "wih_b": u(ks[5], (4 * Hh, E), -bound, bound),
        "whh_b": u(ks[6], (4 * Hh, Hh), -bound, bound),
        "bih_b": u(ks[7], (4 * Hh,), -bound, bound),
        "bhh_b": u(ks[8], (4 * Hh,), -bound, bound),
        # linear_init: uniform(-1, 1) for weight and bias
        "w1": u(ks[9], (L1, 2 * Hh), -1.0, 1.0),
        "b1": u(ks[10], (L1,), -1.0, 1.0),
        "w2": u(ks[11], (F, L1), -1.0, 1.0),
        "b2": u(ks[12], (F,), -1.0, 1.0),
        # init_hidden(): torch.rand(...) — deterministic uniform [0, 1) here
        "h0f": u(ks[13], (B, Hh), 0.0, 1.0),
        "c0f": u(ks[14], (B, Hh), 0.0, 1.0),
        "h0b": u(ks[15], (B, Hh), 0.0, 1.0),
        "c0b": u(ks[16], (B, Hh), 0.0, 1.0),
    }


# ----------------------------------- main --------------------------------------
if __name__ == "__main__":
    key = jax.random.PRNGKey(0)
    pkey, skey = jax.random.split(key, 2)

    params = make_params(pkey)
    prepared = prepare_params(params)      # one-time weight repack (off hot path)

    sents = jax.random.randint(skey, (BATCH, SEQ), 0, VOC_SIZE, dtype=jnp.int32)
    sent_length = jnp.full((BATCH,), SEQ, dtype=jnp.int32)  # unused by forward

    forward = jax.jit(emb_lstm_forward)
    out = jax.block_until_ready(forward(sents, sent_length, prepared))
    assert out.shape == (BATCH, SEQ * F0_DIM), out.shape

    ref = jax.block_until_ready(emb_lstm_reference(sents, params))
    np.testing.assert_allclose(np.asarray(out), np.asarray(ref),
                               rtol=1e-3, atol=1e-3)

    print("KERNEL_OK")
</pallas_src>

<mosaic_0001>
module attributes {stable_mosaic.version = 11 : i64} {
  func.func @emb_lstm_kernel(%arg0: memref<64x2xi32, #tpu.memory_space<vmem>>, %arg1: memref<184x256xf32, #tpu.memory_space<vmem>>, %arg2: memref<160x64xf32, #tpu.memory_space<vmem>>, %arg3: memref<8x32xf32, #tpu.memory_space<vmem>>) attributes {dimension_semantics = [], scalar_prefetch = 0 : i64, scratch_operands = 0 : i64, tpu.core_type = #tpu.core_type<tc>} {
    %c0 = arith.constant 0 : index
    %c0_0 = arith.constant 0 : index
    %0 = vector.load %arg0[%c0, %c0_0] : memref<64x2xi32, #tpu.memory_space<vmem>>, vector<64x2xi32>
    %1 = tpu.iota {dimensions = array<i32: 1>} : vector<64x112xi32>
    %2 = vector.extract_strided_slice %0 {offsets = [0, 0], sizes = [64, 1], strides = [1, 1]} : vector<64x2xi32> to vector<64x1xi32>
    %3 = vector.broadcast %2 : vector<64x1xi32> to vector<64x112xi32>
    %4 = arith.cmpi eq, %1, %3 : vector<64x112xi32>
    %5 = vector.extract_strided_slice %0 {offsets = [0, 1], sizes = [64, 1], strides = [1, 1]} : vector<64x2xi32> to vector<64x1xi32>
    %c56_i32 = arith.constant 56 : i32
    %6 = vector.broadcast %c56_i32 : i32 to vector<64x1xi32>
    %7 = arith.addi %5, %6 : vector<64x1xi32>
    %8 = vector.broadcast %7 : vector<64x1xi32> to vector<64x112xi32>
    %9 = arith.cmpi eq, %1, %8 : vector<64x112xi32>
    %10 = arith.ori %4, %9 : vector<64x112xi1>
    %11 = arith.extui %10 : vector<64x112xi1> to vector<64x112xi32>
    %12 = arith.sitofp %11 : vector<64x112xi32> to vector<64x112xf32>
    %c0_1 = arith.constant 0 : index
    %c0_2 = arith.constant 0 : index
    %13 = vector.load %arg1[%c0_1, %c0_2] : memref<184x256xf32, #tpu.memory_space<vmem>>, vector<112x256xf32>
    %cst = arith.constant dense<0.000000e+00> : vector<64x256xf32>
    %14 = tpu.matmul %12, %13, %cst {dimension_numbers = #tpu.dot_dimension_numbers<[1], [0], [0], [1], [0, 0, 1, 1], [], []>} : vector<64x112xf32>, vector<112x256xf32>, vector<64x256xf32> -> vector<64x256xf32>
    %c176 = arith.constant 176 : index
    %c0_3 = arith.constant 0 : index
    %15 = vector.load %arg1[%c176, %c0_3] : memref<184x256xf32, #tpu.memory_space<vmem>>, vector<1x256xf32>
    %16 = vector.broadcast %15 : vector<1x256xf32> to vector<64x256xf32>
    %17 = arith.addf %14, %16 : vector<64x256xf32>
    %c112 = arith.constant 112 : index
    %c0_4 = arith.constant 0 : index
    %18 = vector.load %arg1[%c112, %c0_4] : memref<184x256xf32, #tpu.memory_space<vmem>>, vector<64x256xf32>
    %c0_5 = arith.constant 0 : index
    %c0_6 = arith.constant 0 : index
    %19 = vector.load %arg2[%c0_5, %c0_6] : memref<160x64xf32, #tpu.memory_space<vmem>>, vector<8x64xf32>
    %c8 = arith.constant 8 : index
    %c0_7 = arith.constant 0 : index
    %20 = vector.load %arg2[%c8, %c0_7] : memref<160x64xf32, #tpu.memory_space<vmem>>, vector<8x64xf32>
    %21 = vector.extract_strided_slice %17 {offsets = [0, 0], sizes = [8, 256], strides = [1, 1]} : vector<64x256xf32> to vector<8x256xf32>
    %cst_8 = arith.constant dense<0.000000e+00> : vector<8x256xf32>
    %22 = tpu.matmul %19, %18, %cst_8 {dimension_numbers = #tpu.dot_dimension_numbers<[1], [0], [0], [1], [0, 0, 1, 1], [], []>} : vector<8x64xf32>, vector<64x256xf32>, vector<8x256xf32> -> vector<8x256xf32>
    %23 = arith.addf %21, %22 : vector<8x256xf32>
    %24 = vector.extract_strided_slice %23 {offsets = [0, 0], sizes = [8, 192], strides = [1, 1]} : vector<8x256xf32> to vector<8x192xf32>
    %25 = arith.negf %24 : vector<8x192xf32>
    %26 = math.exp %25 : vector<8x192xf32>
    %cst_9 = arith.constant 1.000000e+00 : f32
    %27 = vector.broadcast %cst_9 : f32 to vector<8x192xf32>
    %28 = arith.addf %27, %26 : vector<8x192xf32>
    %29 = arith.divf %27, %28 : vector<8x192xf32>
    %30 = vector.extract_strided_slice %23 {offsets = [0, 192], sizes = [8, 64], strides = [1, 1]} : vector<8x256xf32> to vector<8x64xf32>
    %31 = math.tanh %30 : vector<8x64xf32>
    %32 = vector.extract_strided_slice %29 {offsets = [0, 64], sizes = [8, 64], strides = [1, 1]} : vector<8x192xf32> to vector<8x64xf32>
    %33 = arith.mulf %32, %20 : vector<8x64xf32>
    %34 = vector.extract_strided_slice %29 {offsets = [0, 0], sizes = [8, 64], strides = [1, 1]} : vector<8x192xf32> to vector<8x64xf32>
    %35 = arith.mulf %34, %31 : vector<8x64xf32>
    %36 = arith.addf %33, %35 : vector<8x64xf32>
    %37 = vector.extract_strided_slice %29 {offsets = [0, 128], sizes = [8, 64], strides = [1, 1]} : vector<8x192xf32> to vector<8x64xf32>
    %38 = math.tanh %36 : vector<8x64xf32>
    %39 = arith.mulf %37, %38 : vector<8x64xf32>
    %40 = vector.extract_strided_slice %17 {offsets = [8, 0], sizes = [8, 256], strides = [1, 1]} : vector<64x256xf32> to vector<8x256xf32>
    %cst_10 = arith.constant dense<0.000000e+00> : vector<8x256xf32>
    %41 = tpu.matmul %39, %18, %cst_10 {dimension_numbers = #tpu.dot_dimension_numbers<[1], [0], [0], [1], [0, 0, 1, 1], [], []>} : vector<8x64xf32>, vector<64x256xf32>, vector<8x256xf32> -> vector<8x256xf32>
    %42 = arith.addf %40, %41 : vector<8x256xf32>
    %43 = vector.extract_strided_slice %42 {offsets = [0, 0], sizes = [8, 192], strides = [1, 1]} : vector<8x256xf32> to vector<8x192xf32>
    %44 = arith.negf %43 : vector<8x192xf32>
    %45 = math.exp %44 : vector<8x192xf32>
    %cst_11 = arith.constant 1.000000e+00 : f32
    %46 = vector.broadcast %cst_11 : f32 to vector<8x192xf32>
    %47 = arith.addf %46, %45 : vector<8x192xf32>
    %48 = arith.divf %46, %47 : vector<8x192xf32>
    %49 = vector.extract_strided_slice %42 {offsets = [0, 192], sizes = [8, 64], strides = [1, 1]} : vector<8x256xf32> to vector<8x64xf32>
    %50 = math.tanh %49 : vector<8x64xf32>
    %51 = vector.extract_strided_slice %48 {offsets = [0, 64], sizes = [8, 64], strides = [1, 1]} : vector<8x192xf32> to vector<8x64xf32>
    %52 = arith.mulf %51, %36 : vector<8x64xf32>
    %53 = vector.extract_strided_slice %48 {offsets = [0, 0], sizes = [8, 64], strides = [1, 1]} : vector<8x192xf32> to vector<8x64xf32>
    %54 = arith.mulf %53, %50 : vector<8x64xf32>
    %55 = arith.addf %52, %54 : vector<8x64xf32>
    %56 = vector.extract_strided_slice %48 {offsets = [0, 128], sizes = [8, 64], strides = [1, 1]} : vector<8x192xf32> to vector<8x64xf32>
    %57 = math.tanh %55 : vector<8x64xf32>
    %58 = arith.mulf %56, %57 : vector<8x64xf32>
    %59 = vector.extract_strided_slice %17 {offsets = [16, 0], sizes = [8, 256], strides = [1, 1]} : vector<64x256xf32> to vector<8x256xf32>
    %cst_12 = arith.constant dense<0.000000e+00> : vector<8x256xf32>
    %60 = tpu.matmul %58, %18, %cst_12 {dimension_numbers = #tpu.dot_dimension_numbers<[1], [0], [0], [1], [0, 0, 1, 1], [], []>} : vector<8x64xf32>, vector<64x256xf32>, vector<8x256xf32> -> vector<8x256xf32>
    %61 = arith.addf %59, %60 : vector<8x256xf32>
    %62 = vector.extract_strided_slice %61 {offsets = [0, 0], sizes = [8, 192], strides = [1, 1]} : vector<8x256xf32> to vector<8x192xf32>
    %63 = arith.negf %62 : vector<8x192xf32>
    %64 = math.exp %63 : vector<8x192xf32>
    %cst_13 = arith.constant 1.000000e+00 : f32
    %65 = vector.broadcast %cst_13 : f32 to vector<8x192xf32>
    %66 = arith.addf %65, %64 : vector<8x192xf32>
    %67 = arith.divf %65, %66 : vector<8x192xf32>
    %68 = vector.extract_strided_slice %61 {offsets = [0, 192], sizes = [8, 64], strides = [1, 1]} : vector<8x256xf32> to vector<8x64xf32>
    %69 = math.tanh %68 : vector<8x64xf32>
    %70 = vector.extract_strided_slice %67 {offsets = [0, 64], sizes = [8, 64], strides = [1, 1]} : vector<8x192xf32> to vector<8x64xf32>
    %71 = arith.mulf %70, %55 : vector<8x64xf32>
    %72 = vector.extract_strided_slice %67 {offsets = [0, 0], sizes = [8, 64], strides = [1, 1]} : vector<8x192xf32> to vector<8x64xf32>
    %73 = arith.mulf %72, %69 : vector<8x64xf32>
    %74 = arith.addf %71, %73 : vector<8x64xf32>
    %75 = vector.extract_strided_slice %67 {offsets = [0, 128], sizes = [8, 64], strides = [1, 1]} : vector<8x192xf32> to vector<8x64xf32>
    %76 = math.tanh %74 : vector<8x64xf32>
    %77 = arith.mulf %75, %76 : vector<8x64xf32>
    %78 = vector.extract_strided_slice %17 {offsets = [24, 0], sizes = [8, 256], strides = [1, 1]} : vector<64x256xf32> to vector<8x256xf32>
    %cst_14 = arith.constant dense<0.000000e+00> : vector<8x256xf32>
    %79 = tpu.matmul %77, %18, %cst_14 {dimension_numbers = #tpu.dot_dimension_numbers<[1], [0], [0], [1], [0, 0, 1, 1], [], []>} : vector<8x64xf32>, vector<64x256xf32>, vector<8x256xf32> -> vector<8x256xf32>
    %80 = arith.addf %78, %79 : vector<8x256xf32>
    %81 = vector.extract_strided_slice %80 {offsets = [0, 0], sizes = [8, 192], strides = [1, 1]} : vector<8x256xf32> to vector<8x192xf32>
    %82 = arith.negf %81 : vector<8x192xf32>
    %83 = math.exp %82 : vector<8x192xf32>
    %cst_15 = arith.constant 1.000000e+00 : f32
    %84 = vector.broadcast %cst_15 : f32 to vector<8x192xf32>
    %85 = arith.addf %84, %83 : vector<8x192xf32>
    %86 = arith.divf %84, %85 : vector<8x192xf32>
    %87 = vector.extract_strided_slice %80 {offsets = [0, 192], sizes = [8, 64], strides = [1, 1]} : vector<8x256xf32> to vector<8x64xf32>
    %88 = math.tanh %87 : vector<8x64xf32>
    %89 = vector.extract_strided_slice %86 {offsets = [0, 64], sizes = [8, 64], strides = [1, 1]} : vector<8x192xf32> to vector<8x64xf32>
    %90 = arith.mulf %89, %74 : vector<8x64xf32>
    %91 = vector.extract_strided_slice %86 {offsets = [0, 0], sizes = [8, 64], strides = [1, 1]} : vector<8x192xf32> to vector<8x64xf32>
    %92 = arith.mulf %91, %88 : vector<8x64xf32>
    %93 = arith.addf %90, %92 : vector<8x64xf32>
    %94 = vector.extract_strided_slice %86 {offsets = [0, 128], sizes = [8, 64], strides = [1, 1]} : vector<8x192xf32> to vector<8x64xf32>
    %95 = math.tanh %93 : vector<8x64xf32>
    %96 = arith.mulf %94, %95 : vector<8x64xf32>
    %97 = vector.extract_strided_slice %17 {offsets = [32, 0], sizes = [8, 256], strides = [1, 1]} : vector<64x256xf32> to vector<8x256xf32>
    %cst_16 = arith.constant dense<0.000000e+00> : vector<8x256xf32>
    %98 = tpu.matmul %96, %18, %cst_16 {dimension_numbers = #tpu.dot_dimension_numbers<[1], [0], [0], [1], [0, 0, 1, 1], [], []>} : vector<8x64xf32>, vector<64x256xf32>, vector<8x256xf32> -> vector<8x256xf32>
    %99 = arith.addf %97, %98 : vector<8x256xf32>
    %100 = vector.extract_strided_slice %99 {offsets = [0, 0], sizes = [8, 192], strides = [1, 1]} : vector<8x256xf32> to vector<8x192xf32>
    %101 = arith.negf %100 : vector<8x192xf32>
    %102 = math.exp %101 : vector<8x192xf32>
    %cst_17 = arith.constant 1.000000e+00 : f32
    %103 = vector.broadcast %cst_17 : f32 to vector<8x192xf32>
    %104 = arith.addf %103, %102 : vector<8x192xf32>
    %105 = arith.divf %103, %104 : vector<8x192xf32>
    %106 = vector.extract_strided_slice %99 {offsets = [0, 192], sizes = [8, 64], strides = [1, 1]} : vector<8x256xf32> to vector<8x64xf32>
    %107 = math.tanh %106 : vector<8x64xf32>
    %108 = vector.extract_strided_slice %105 {offsets = [0, 64], sizes = [8, 64], strides = [1, 1]} : vector<8x192xf32> to vector<8x64xf32>
    %109 = arith.mulf %108, %93 : vector<8x64xf32>
    %110 = vector.extract_strided_slice %105 {offsets = [0, 0], sizes = [8, 64], strides = [1, 1]} : vector<8x192xf32> to vector<8x64xf32>
    %111 = arith.mulf %110, %107 : vector<8x64xf32>
    %112 = arith.addf %109, %111 : vector<8x64xf32>
    %113 = vector.extract_strided_slice %105 {offsets = [0, 128], sizes = [8, 64], strides = [1, 1]} : vector<8x192xf32> to vector<8x64xf32>
    %114 = math.tanh %112 : vector<8x64xf32>
    %115 = arith.mulf %113, %114 : vector<8x64xf32>
    %116 = vector.extract_strided_slice %17 {offsets = [40, 0], sizes = [8, 256], strides = [1, 1]} : vector<64x256xf32> to vector<8x256xf32>
    %cst_18 = arith.constant dense<0.000000e+00> : vector<8x256xf32>
    %117 = tpu.matmul %115, %18, %cst_18 {dimension_numbers = #tpu.dot_dimension_numbers<[1], [0], [0], [1], [0, 0, 1, 1], [], []>} : vector<8x64xf32>, vector<64x256xf32>, vector<8x256xf32> -> vector<8x256xf32>
    %118 = arith.addf %116, %117 : vector<8x256xf32>
    %119 = vector.extract_strided_slice %118 {offsets = [0, 0], sizes = [8, 192], strides = [1, 1]} : vector<8x256xf32> to vector<8x192xf32>
    %120 = arith.negf %119 : vector<8x192xf32>
    %121 = math.exp %120 : vector<8x192xf32>
    %cst_19 = arith.constant 1.000000e+00 : f32
    %122 = vector.broadcast %cst_19 : f32 to vector<8x192xf32>
    %123 = arith.addf %122, %121 : vector<8x192xf32>
    %124 = arith.divf %122, %123 : vector<8x192xf32>
    %125 = vector.extract_strided_slice %118 {offsets = [0, 192], sizes = [8, 64], strides = [1, 1]} : vector<8x256xf32> to vector<8x64xf32>
    %126 = math.tanh %125 : vector<8x64xf32>
    %127 = vector.extract_strided_slice %124 {offsets = [0, 64], sizes = [8, 64], strides = [1, 1]} : vector<8x192xf32> to vector<8x64xf32>
    %128 = arith.mulf %127, %112 : vector<8x64xf32>
    %129 = vector.extract_strided_slice %124 {offsets = [0, 0], sizes = [8, 64], strides = [1, 1]} : vector<8x192xf32> to vector<8x64xf32>
    %130 = arith.mulf %129, %126 : vector<8x64xf32>
    %131 = arith.addf %128, %130 : vector<8x64xf32>
    %132 = vector.extract_strided_slice %124 {offsets = [0, 128], sizes = [8, 64], strides = [1, 1]} : vector<8x192xf32> to vector<8x64xf32>
    %133 = math.tanh %131 : vector<8x64xf32>
    %134 = arith.mulf %132, %133 : vector<8x64xf32>
    %135 = vector.extract_strided_slice %17 {offsets = [48, 0], sizes = [8, 256], strides = [1, 1]} : vector<64x256xf32> to vector<8x256xf32>
    %cst_20 = arith.constant dense<0.000000e+00> : vector<8x256xf32>
    %136 = tpu.matmul %134, %18, %cst_20 {dimension_numbers = #tpu.dot_dimension_numbers<[1], [0], [0], [1], [0, 0, 1, 1], [], []>} : vector<8x64xf32>, vector<64x256xf32>, vector<8x256xf32> -> vector<8x256xf32>
    %137 = arith.addf %135, %136 : vector<8x256xf32>
    %138 = vector.extract_strided_slice %137 {offsets = [0, 0], sizes = [8, 192], strides = [1, 1]} : vector<8x256xf32> to vector<8x192xf32>
    %139 = arith.negf %138 : vector<8x192xf32>
    %140 = math.exp %139 : vector<8x192xf32>
    %cst_21 = arith.constant 1.000000e+00 : f32
    %141 = vector.broadcast %cst_21 : f32 to vector<8x192xf32>
    %142 = arith.addf %141, %140 : vector<8x192xf32>
    %143 = arith.divf %141, %142 : vector<8x192xf32>
    %144 = vector.extract_strided_slice %137 {offsets = [0, 192], sizes = [8, 64], strides = [1, 1]} : vector<8x256xf32> to vector<8x64xf32>
    %145 = math.tanh %144 : vector<8x64xf32>
    %146 = vector.extract_strided_slice %143 {offsets = [0, 64], sizes = [8, 64], strides = [1, 1]} : vector<8x192xf32> to vector<8x64xf32>
    %147 = arith.mulf %146, %131 : vector<8x64xf32>
    %148 = vector.extract_strided_slice %143 {offsets = [0, 0], sizes = [8, 64], strides = [1, 1]} : vector<8x192xf32> to vector<8x64xf32>
    %149 = arith.mulf %148, %145 : vector<8x64xf32>
    %150 = arith.addf %147, %149 : vector<8x64xf32>
    %151 = vector.extract_strided_slice %143 {offsets = [0, 128], sizes = [8, 64], strides = [1, 1]} : vector<8x192xf32> to vector<8x64xf32>
    %152 = math.tanh %150 : vector<8x64xf32>
    %153 = arith.mulf %151, %152 : vector<8x64xf32>
    %154 = vector.extract_strided_slice %17 {offsets = [56, 0], sizes = [8, 256], strides = [1, 1]} : vector<64x256xf32> to vector<8x256xf32>
    %cst_22 = arith.constant dense<0.000000e+00> : vector<8x256xf32>
    %155 = tpu.matmul %153, %18, %cst_22 {dimension_numbers = #tpu.dot_dimension_numbers<[1], [0], [0], [1], [0, 0, 1, 1], [], []>} : vector<8x64xf32>, vector<64x256xf32>, vector<8x256xf32> -> vector<8x256xf32>
    %156 = arith.addf %154, %155 : vector<8x256xf32>
    %157 = vector.extract_strided_slice %156 {offsets = [0, 0], sizes = [8, 192], strides = [1, 1]} : vector<8x256xf32> to vector<8x192xf32>
    %158 = arith.negf %157 : vector<8x192xf32>
    %159 = math.exp %158 : vector<8x192xf32>
    %cst_23 = arith.constant 1.000000e+00 : f32
    %160 = vector.broadcast %cst_23 : f32 to vector<8x192xf32>
    %161 = arith.addf %160, %159 : vector<8x192xf32>
    %162 = arith.divf %160, %161 : vector<8x192xf32>
    %163 = vector.extract_strided_slice %156 {offsets = [0, 192], sizes = [8, 64], strides = [1, 1]} : vector<8x256xf32> to vector<8x64xf32>
    %164 = math.tanh %163 : vector<8x64xf32>
    %165 = vector.extract_strided_slice %162 {offsets = [0, 64], sizes = [8, 64], strides = [1, 1]} : vector<8x192xf32> to vector<8x64xf32>
    %166 = arith.mulf %165, %150 : vector<8x64xf32>
    %167 = vector.extract_strided_slice %162 {offsets = [0, 0], sizes = [8, 64], strides = [1, 1]} : vector<8x192xf32> to vector<8x64xf32>
    %168 = arith.mulf %167, %164 : vector<8x64xf32>
    %169 = arith.addf %166, %168 : vector<8x64xf32>
    %170 = vector.extract_strided_slice %162 {offsets = [0, 128], sizes = [8, 64], strides = [1, 1]} : vector<8x192xf32> to vector<8x64xf32>
    %171 = math.tanh %169 : vector<8x64xf32>
    %172 = arith.mulf %170, %171 : vector<8x64xf32>
    %173 = vector.extract_strided_slice %39 {offsets = [0, 0], sizes = [8, 32], strides = [1, 1]} : vector<8x64xf32> to vector<8x32xf32>
    %174 = vector.extract_strided_slice %172 {offsets = [0, 32], sizes = [8, 32], strides = [1, 1]} : vector<8x64xf32> to vector<8x32xf32>
    %175 = tpu.concatenate %173, %174 in 1 : vector<8x32xf32>, vector<8x32xf32> -> vector<8x64xf32>
    %176 = vector.extract_strided_slice %58 {offsets = [0, 0], sizes = [8, 32], strides = [1, 1]} : vector<8x64xf32> to vector<8x32xf32>
    %177 = vector.extract_strided_slice %153 {offsets = [0, 32], sizes = [8, 32], strides = [1, 1]} : vector<8x64xf32> to vector<8x32xf32>
    %178 = tpu.concatenate %176, %177 in 1 : vector<8x32xf32>, vector<8x32xf32> -> vector<8x64xf32>
    %179 = vector.extract_strided_slice %77 {offsets = [0, 0], sizes = [8, 32], strides = [1, 1]} : vector<8x64xf32> to vector<8x32xf32>
    %180 = vector.extract_strided_slice %134 {offsets = [0, 32], sizes = [8, 32], strides = [1, 1]} : vector<8x64xf32> to vector<8x32xf32>
    %181 = tpu.concatenate %179, %180 in 1 : vector<8x32xf32>, vector<8x32xf32> -> vector<8x64xf32>
    %182 = vector.extract_strided_slice %96 {offsets = [0, 0], sizes = [8, 32], strides = [1, 1]} : vector<8x64xf32> to vector<8x32xf32>
    %183 = vector.extract_strided_slice %115 {offsets = [0, 32], sizes = [8, 32], strides = [1, 1]} : vector<8x64xf32> to vector<8x32xf32>
    %184 = tpu.concatenate %182, %183 in 1 : vector<8x32xf32>, vector<8x32xf32> -> vector<8x64xf32>
    %185 = vector.extract_strided_slice %115 {offsets = [0, 0], sizes = [8, 32], strides = [1, 1]} : vector<8x64xf32> to vector<8x32xf32>
    %186 = vector.extract_strided_slice %96 {offsets = [0, 32], sizes = [8, 32], strides = [1, 1]} : vector<8x64xf32> to vector<8x32xf32>
    %187 = tpu.concatenate %185, %186 in 1 : vector<8x32xf32>, vector<8x32xf32> -> vector<8x64xf32>
    %188 = vector.extract_strided_slice %134 {offsets = [0, 0], sizes = [8, 32], strides = [1, 1]} : vector<8x64xf32> to vector<8x32xf32>
    %189 = vector.extract_strided_slice %77 {offsets = [0, 32], sizes = [8, 32], strides = [1, 1]} : vector<8x64xf32> to vector<8x32xf32>
    %190 = tpu.concatenate %188, %189 in 1 : vector<8x32xf32>, vector<8x32xf32> -> vector<8x64xf32>
    %191 = vector.extract_strided_slice %153 {offsets = [0, 0], sizes = [8, 32], strides = [1, 1]} : vector<8x64xf32> to vector<8x32xf32>
    %192 = vector.extract_strided_slice %58 {offsets = [0, 32], sizes = [8, 32], strides = [1, 1]} : vector<8x64xf32> to vector<8x32xf32>
    %193 = tpu.concatenate %191, %192 in 1 : vector<8x32xf32>, vector<8x32xf32> -> vector<8x64xf32>
    %194 = vector.extract_strided_slice %172 {offsets = [0, 0], sizes = [8, 32], strides = [1, 1]} : vector<8x64xf32> to vector<8x32xf32>
    %195 = vector.extract_strided_slice %39 {offsets = [0, 32], sizes = [8, 32], strides = [1, 1]} : vector<8x64xf32> to vector<8x32xf32>
    %196 = tpu.concatenate %194, %195 in 1 : vector<8x32xf32>, vector<8x32xf32> -> vector<8x64xf32>
    %197 = tpu.concatenate %175, %178, %181, %184, %187, %190, %193, %196 in 0 : vector<8x64xf32>, vector<8x64xf32>, vector<8x64xf32>, vector<8x64xf32>, vector<8x64xf32>, vector<8x64xf32>, vector<8x64xf32>, vector<8x64xf32> -> vector<64x64xf32>
    %c16 = arith.constant 16 : index
    %c0_24 = arith.constant 0 : index
    %198 = vector.load %arg2[%c16, %c0_24] : memref<160x64xf32, #tpu.memory_space<vmem>>, vector<64x64xf32>
    %c80 = arith.constant 80 : index
    %c0_25 = arith.constant 0 : index
    %199 = vector.load %arg2[%c80, %c0_25] : memref<160x64xf32, #tpu.memory_space<vmem>>, vector<1x64xf32>
    %c88 = arith.constant 88 : index
    %c0_26 = arith.constant 0 : index
    %200 = vector.load %arg2[%c88, %c0_26] : memref<160x64xf32, #tpu.memory_space<vmem>>, vector<64x4xf32>
    %c152 = arith.constant 152 : index
    %c0_27 = arith.constant 0 : index
    %201 = vector.load %arg2[%c152, %c0_27] : memref<160x64xf32, #tpu.memory_space<vmem>>, vector<1x4xf32>
    %cst_28 = arith.constant dense<0.000000e+00> : vector<64x64xf32>
    %202 = tpu.matmul %197, %198, %cst_28 {dimension_numbers = #tpu.dot_dimension_numbers<[1], [0], [0], [1], [0, 0, 1, 1], [], []>} : vector<64x64xf32>, vector<64x64xf32>, vector<64x64xf32> -> vector<64x64xf32>
    %203 = vector.broadcast %199 : vector<1x64xf32> to vector<64x64xf32>
    %204 = arith.addf %202, %203 : vector<64x64xf32>
    %cst_29 = arith.constant 0.000000e+00 : f32
    %205 = vector.broadcast %cst_29 : f32 to vector<64x64xf32>
    %206 = arith.maximumf %204, %205 : vector<64x64xf32>
    %207 = vector.extract_strided_slice %206 {offsets = [0, 0], sizes = [8, 64], strides = [1, 1]} : vector<64x64xf32> to vector<8x64xf32>
    %cst_30 = arith.constant dense<0.000000e+00> : vector<8x4xf32>
    %208 = tpu.matmul %207, %200, %cst_30 {dimension_numbers = #tpu.dot_dimension_numbers<[1], [0], [0], [1], [0, 0, 1, 1], [], []>} : vector<8x64xf32>, vector<64x4xf32>, vector<8x4xf32> -> vector<8x4xf32>
    %209 = vector.broadcast %201 : vector<1x4xf32> to vector<8x4xf32>
    %210 = arith.addf %208, %209 : vector<8x4xf32>
    %211 = vector.extract_strided_slice %206 {offsets = [8, 0], sizes = [8, 64], strides = [1, 1]} : vector<64x64xf32> to vector<8x64xf32>
    %cst_31 = arith.constant dense<0.000000e+00> : vector<8x4xf32>
    %212 = tpu.matmul %211, %200, %cst_31 {dimension_numbers = #tpu.dot_dimension_numbers<[1], [0], [0], [1], [0, 0, 1, 1], [], []>} : vector<8x64xf32>, vector<64x4xf32>, vector<8x4xf32> -> vector<8x4xf32>
    %213 = vector.broadcast %201 : vector<1x4xf32> to vector<8x4xf32>
    %214 = arith.addf %212, %213 : vector<8x4xf32>
    %215 = vector.extract_strided_slice %206 {offsets = [16, 0], sizes = [8, 64], strides = [1, 1]} : vector<64x64xf32> to vector<8x64xf32>
    %cst_32 = arith.constant dense<0.000000e+00> : vector<8x4xf32>
    %216 = tpu.matmul %215, %200, %cst_32 {dimension_numbers = #tpu.dot_dimension_numbers<[1], [0], [0], [1], [0, 0, 1, 1], [], []>} : vector<8x64xf32>, vector<64x4xf32>, vector<8x4xf32> -> vector<8x4xf32>
    %217 = vector.broadcast %201 : vector<1x4xf32> to vector<8x4xf32>
    %218 = arith.addf %216, %217 : vector<8x4xf32>
    %219 = vector.extract_strided_slice %206 {offsets = [24, 0], sizes = [8, 64], strides = [1, 1]} : vector<64x64xf32> to vector<8x64xf32>
    %cst_33 = arith.constant dense<0.000000e+00> : vector<8x4xf32>
    %220 = tpu.matmul %219, %200, %cst_33 {dimension_numbers = #tpu.dot_dimension_numbers<[1], [0], [0], [1], [0, 0, 1, 1], [], []>} : vector<8x64xf32>, vector<64x4xf32>, vector<8x4xf32> -> vector<8x4xf32>
    %221 = vector.broadcast %201 : vector<1x4xf32> to vector<8x4xf32>
    %222 = arith.addf %220, %221 : vector<8x4xf32>
    %223 = vector.extract_strided_slice %206 {offsets = [32, 0], sizes = [8, 64], strides = [1, 1]} : vector<64x64xf32> to vector<8x64xf32>
    %cst_34 = arith.constant dense<0.000000e+00> : vector<8x4xf32>
    %224 = tpu.matmul %223, %200, %cst_34 {dimension_numbers = #tpu.dot_dimension_numbers<[1], [0], [0], [1], [0, 0, 1, 1], [], []>} : vector<8x64xf32>, vector<64x4xf32>, vector<8x4xf32> -> vector<8x4xf32>
    %225 = vector.broadcast %201 : vector<1x4xf32> to vector<8x4xf32>
    %226 = arith.addf %224, %225 : vector<8x4xf32>
    %227 = vector.extract_strided_slice %206 {offsets = [40, 0], sizes = [8, 64], strides = [1, 1]} : vector<64x64xf32> to vector<8x64xf32>
    %cst_35 = arith.constant dense<0.000000e+00> : vector<8x4xf32>
    %228 = tpu.matmul %227, %200, %cst_35 {dimension_numbers = #tpu.dot_dimension_numbers<[1], [0], [0], [1], [0, 0, 1, 1], [], []>} : vector<8x64xf32>, vector<64x4xf32>, vector<8x4xf32> -> vector<8x4xf32>
    %229 = vector.broadcast %201 : vector<1x4xf32> to vector<8x4xf32>
    %230 = arith.addf %228, %229 : vector<8x4xf32>
    %231 = vector.extract_strided_slice %206 {offsets = [48, 0], sizes = [8, 64], strides = [1, 1]} : vector<64x64xf32> to vector<8x64xf32>
    %cst_36 = arith.constant dense<0.000000e+00> : vector<8x4xf32>
    %232 = tpu.matmul %231, %200, %cst_36 {dimension_numbers = #tpu.dot_dimension_numbers<[1], [0], [0], [1], [0, 0, 1, 1], [], []>} : vector<8x64xf32>, vector<64x4xf32>, vector<8x4xf32> -> vector<8x4xf32>
    %233 = vector.broadcast %201 : vector<1x4xf32> to vector<8x4xf32>
    %234 = arith.addf %232, %233 : vector<8x4xf32>
    %235 = vector.extract_strided_slice %206 {offsets = [56, 0], sizes = [8, 64], strides = [1, 1]} : vector<64x64xf32> to vector<8x64xf32>
    %cst_37 = arith.constant dense<0.000000e+00> : vector<8x4xf32>
    %236 = tpu.matmul %235, %200, %cst_37 {dimension_numbers = #tpu.dot_dimension_numbers<[1], [0], [0], [1], [0, 0, 1, 1], [], []>} : vector<8x64xf32>, vector<64x4xf32>, vector<8x4xf32> -> vector<8x4xf32>
    %237 = vector.broadcast %201 : vector<1x4xf32> to vector<8x4xf32>
    %238 = arith.addf %236, %237 : vector<8x4xf32>
    %239 = tpu.concatenate %210, %214, %218, %222, %226, %230, %234, %238 in 1 : vector<8x4xf32>, vector<8x4xf32>, vector<8x4xf32>, vector<8x4xf32>, vector<8x4xf32>, vector<8x4xf32>, vector<8x4xf32>, vector<8x4xf32> -> vector<8x32xf32>
    %c0_38 = arith.constant 0 : index
    %c0_39 = arith.constant 0 : index
    %240 = vector.load %arg3[%c0_38, %c0_39] : memref<8x32xf32, #tpu.memory_space<vmem>>, vector<8x32xf32>
    tpu.vector_store %arg3[%c0_38, %c0_39], %239 {strides = array<i32>} : memref<8x32xf32, #tpu.memory_space<vmem>>, vector<8x32xf32>,
    return
  }
}

</mosaic_0001>

<llo_original>
// kernel: emb_lstm_forward.1
$region0: #{emb_lstm_forward.1}
  #allocation0 [shape = 'u32[]', space=smem, size = 0x4, offset = 0x4, fixed_abs, tag = 'smem constant byte address 0x4 - core index']
  #allocation1 [shape = 'u32[144,128]{1,0:T(1,128)}', space=vmem, size = 0x12000, scoped, tag = 'internal scratch']
  %s0 = inlined_call_operand.vmem [shape: s32[64,2], index: 0, kind: input, shape index: {}]
  %s1 = inlined_call_operand.vmem [shape: f32[184,256], index: 1, kind: input, shape index: {}]
  %s2 = inlined_call_operand.vmem [shape: f32[160,64], index: 2, kind: input, shape index: {}]
  %s3 = inlined_call_operand.vmem [shape: f32[8,32], index: 3, kind: output, shape index: {}]
  %s4 = sld [smem:[#allocation0]]
  $region22: #{emb_lstm_forward.1} parent=0
    _
  %s6 = ssub.s32 1, %s4
  %s7 = scalar_select 0, %s6, %s4
  // Predicated region
  $region2: #{emb_lstm_forward.1} parent=0 // pred_check
    _
  $region3: #{emb_lstm_forward.1} parent=0 // pred_check_branch
    %9 = sbr.rel (0) target = $region5
  $region4: #{emb_lstm_forward.1} parent=0 // pred_region
    _
  $region5: #{emb_lstm_forward.1} parent=0 // pred_fallthru
    _
  // Predicated region
  $region6: #{emb_lstm_forward.1} parent=0 // pred_check
    _
  $region7: #{emb_lstm_forward.1} parent=0 // pred_check_branch
    %11 = sbr.rel (0) target = $region9
  $region8: #{emb_lstm_forward.1} parent=0 // pred_region
    _
  $region9: #{emb_lstm_forward.1} parent=0 // pred_fallthru
    _
  // Predicated region
  $region10: #{emb_lstm_forward.1} parent=0 // pred_check
    _
  $region11: #{emb_lstm_forward.1} parent=0 // pred_check_branch
    %13 = sbr.rel (0) target = $region13
  $region12: #{emb_lstm_forward.1} parent=0 // pred_region
    _
  $region13: #{emb_lstm_forward.1} parent=0 // pred_fallthru
    _
  %v14 = vld [vmem:[%s0] sm:$0xff]
  %v15 = vld [vmem:[%s0 + $0x8] sm:$0xff]
  %v16 = vld [vmem:[%s0 + $0x10] sm:$0xff]
  %v17 = vld [vmem:[%s0 + $0x18] sm:$0xff]
  %v18 = vld [vmem:[%s0 + $0x20] sm:$0xff]
  %v19 = vld [vmem:[%s0 + $0x28] sm:$0xff]
  %v20 = vld [vmem:[%s0 + $0x30] sm:$0xff]
  %v21 = vld [vmem:[%s0 + $0x38] sm:$0xff]
  %v22 = vlaneseq
  %v23 = vand.u32 %v22, 127
  %24 = vset.pattern.permute.xlu0 0
  %25 = vperm.xlu0 %24, %v14
  %v26 = vpop.permute.xlu0 %25
  %27 = vset.pattern.permute.xlu0 0
  %28 = vperm.xlu0 %27, %v15
  %v29 = vpop.permute.xlu0 %28
  %30 = vset.pattern.permute.xlu0 0
  %31 = vperm.xlu0 %30, %v16
  %v32 = vpop.permute.xlu0 %31
  %33 = vset.pattern.permute.xlu0 0
  %34 = vperm.xlu0 %33, %v17
  %v35 = vpop.permute.xlu0 %34
  %36 = vset.pattern.permute.xlu0 0
  %37 = vperm.xlu0 %36, %v18
  %v38 = vpop.permute.xlu0 %37
  %39 = vset.pattern.permute.xlu0 0
  %40 = vperm.xlu0 %39, %v19
  %v41 = vpop.permute.xlu0 %40
  %42 = vset.pattern.permute.xlu0 0
  %43 = vperm.xlu0 %42, %v20
  %v44 = vpop.permute.xlu0 %43
  %45 = vset.pattern.permute.xlu0 0
  %46 = vperm.xlu0 %45, %v21
  %v47 = vpop.permute.xlu0 %46
  %vm48 = vcmp.eq.s32.totalorder %v23, %v26
  %vm49 = vcmp.eq.s32.totalorder %v23, %v29
  %vm50 = vcmp.eq.s32.totalorder %v23, %v32
  %vm51 = vcmp.eq.s32.totalorder %v23, %v35
  %vm52 = vcmp.eq.s32.totalorder %v23, %v38
  %vm53 = vcmp.eq.s32.totalorder %v23, %v41
  %vm54 = vcmp.eq.s32.totalorder %v23, %v44
  %vm55 = vcmp.eq.s32.totalorder %v23, %v47
  %v56 = vadd.s32 %v14, 56
  %v57 = vadd.s32 %v15, 56
  %v58 = vadd.s32 %v16, 56
  %v59 = vadd.s32 %v17, 56
  %v60 = vadd.s32 %v18, 56
  %v61 = vadd.s32 %v19, 56
  %v62 = vadd.s32 %v20, 56
  %v63 = vadd.s32 %v21, 56
  %64 = vset.pattern.permute.xlu0 1
  %65 = vperm.xlu0 %64, %v56
  %v66 = vpop.permute.xlu0 %65
  %67 = vset.pattern.permute.xlu0 1
  %68 = vperm.xlu0 %67, %v57
  %v69 = vpop.permute.xlu0 %68
  %70 = vset.pattern.permute.xlu0 1
  %71 = vperm.xlu0 %70, %v58
  %v72 = vpop.permute.xlu0 %71
  %73 = vset.pattern.permute.xlu0 1
  %74 = vperm.xlu0 %73, %v59
  %v75 = vpop.permute.xlu0 %74
  %76 = vset.pattern.permute.xlu0 1
  %77 = vperm.xlu0 %76, %v60
  %v78 = vpop.permute.xlu0 %77
  %79 = vset.pattern.permute.xlu0 1
  %80 = vperm.xlu0 %79, %v61
  %v81 = vpop.permute.xlu0 %80
  %82 = vset.pattern.permute.xlu0 1
  %83 = vperm.xlu0 %82, %v62
  %v84 = vpop.permute.xlu0 %83
  %85 = vset.pattern.permute.xlu0 1
  %86 = vperm.xlu0 %85, %v63
  %v87 = vpop.permute.xlu0 %86
  %vm88 = vcmp.eq.s32.totalorder %v23, %v66
  %vm89 = vcmp.eq.s32.totalorder %v23, %v69
  %vm90 = vcmp.eq.s32.totalorder %v23, %v72
  %vm91 = vcmp.eq.s32.totalorder %v23, %v75
  %vm92 = vcmp.eq.s32.totalorder %v23, %v78
  %vm93 = vcmp.eq.s32.totalorder %v23, %v81
  %vm94 = vcmp.eq.s32.totalorder %v23, %v84
  %vm95 = vcmp.eq.s32.totalorder %v23, %v87
  %vm96 = vmor %vm48, %vm88
  %vm97 = vmor %vm49, %vm89
  %vm98 = vmor %vm50, %vm90
  %vm99 = vmor %vm51, %vm91
  %vm100 = vmor %vm52, %vm92
  %vm101 = vmor %vm53, %vm93
  %vm102 = vmor %vm54, %vm94
  %vm103 = vmor %vm55, %vm95
  %v104 = vsel %vm96, 1, 0
  %v105 = vsel %vm97, 1, 0
  %v106 = vsel %vm98, 1, 0
  %v107 = vsel %vm99, 1, 0
  %v108 = vsel %vm100, 1, 0
  %v109 = vsel %vm101, 1, 0
  %v110 = vsel %vm102, 1, 0
  %v111 = vsel %vm103, 1, 0
  %v112 = vcvt.s32.f32 %v104
  %v113 = vcvt.s32.f32 %v105
  %v114 = vcvt.s32.f32 %v106
  %v115 = vcvt.s32.f32 %v107
  %v116 = vcvt.s32.f32 %v108
  %v117 = vcvt.s32.f32 %v109
  %v118 = vcvt.s32.f32 %v110
  %v119 = vcvt.s32.f32 %v111
  %v120 = vld [vmem:[%s1] sm:$0xff]
  %v121 = vld [vmem:[%s1 + $0x8] sm:$0xff]
  %v122 = vld [vmem:[%s1 + $0x10] sm:$0xff]
  %v123 = vld [vmem:[%s1 + $0x18] sm:$0xff]
  %v124 = vld [vmem:[%s1 + $0x20] sm:$0xff]
  %v125 = vld [vmem:[%s1 + $0x28] sm:$0xff]
  %v126 = vld [vmem:[%s1 + $0x30] sm:$0xff]
  %v127 = vld [vmem:[%s1 + $0x38] sm:$0xff]
  %v128 = vld [vmem:[%s1 + $0x40] sm:$0xff]
  %v129 = vld [vmem:[%s1 + $0x48] sm:$0xff]
  %v130 = vld [vmem:[%s1 + $0x50] sm:$0xff]
  %v131 = vld [vmem:[%s1 + $0x58] sm:$0xff]
  %v132 = vld [vmem:[%s1 + $0x60] sm:$0xff]
  %v133 = vld [vmem:[%s1 + $0x68] sm:$0xff]
  %v134 = vld [vmem:[%s1 + $0x70] sm:$0xff]
  %v135 = vld [vmem:[%s1 + $0x78] sm:$0xff]
  %v136 = vld [vmem:[%s1 + $0x80] sm:$0xff]
  %v137 = vld [vmem:[%s1 + $0x88] sm:$0xff]
  %v138 = vld [vmem:[%s1 + $0x90] sm:$0xff]
  %v139 = vld [vmem:[%s1 + $0x98] sm:$0xff]
  %v140 = vld [vmem:[%s1 + $0xa0] sm:$0xff]
  %v141 = vld [vmem:[%s1 + $0xa8] sm:$0xff]
  %v142 = vld [vmem:[%s1 + $0xb0] sm:$0xff]
  %v143 = vld [vmem:[%s1 + $0xb8] sm:$0xff]
  %v144 = vld [vmem:[%s1 + $0xc0] sm:$0xff]
  %v145 = vld [vmem:[%s1 + $0xc8] sm:$0xff]
  %v146 = vld [vmem:[%s1 + $0xd0] sm:$0xff]
  %v147 = vld [vmem:[%s1 + $0xd8] sm:$0xff]
  %s148 = scalar_lea.vmem %s1, 352
  %v149 = vld [vmem:[%s148] ss:$8 sm:$0x3]
  %v151 = vlaneseq
  %v152 = vshrl.u32 %v151, 7
  %v153 = vsub.s32 0, %v152
  %v154 = vrot.slane %v149, %v153
  %v155 = vlaneseq
  %v156 = vshrl.u32 %v155, 7
  %v157 = vsub.s32 1, %v156
  %v158 = vrot.slane %v149, %v157
  %vm161 = vcmask 916480
  %v163 = vsel %vm161, %v112, 0
  %v166 = vsel %vm161, %v113, 0
  %v169 = vsel %vm161, %v114, 0
  %v172 = vsel %vm161, %v115, 0
  %v175 = vsel %vm161, %v116, 0
  %v178 = vsel %vm161, %v117, 0
  %v181 = vsel %vm161, %v118, 0
  %v184 = vsel %vm161, %v119, 0
  %186 = vmatprep.subr.mxu0 %v121
  %187 = vmatpush1.msra.mxu0 %v120
  %188 = vmatprep.subr.mxu0 %v123
  %189 = vmatpush1.msra.mxu0 %v122
  %190 = vmatprep.subr.mxu0 %v125
  %191 = vmatpush1.msra.mxu0 %v124
  %192 = vmatprep.subr.mxu0 %v127
  %193 = vmatpush1.msra.mxu0 %v126
  %194 = vmatprep.subr.mxu0 %v129
  %195 = vmatpush1.msra.mxu0 %v128
  %196 = vmatprep.subr.mxu0 %v131
  %197 = vmatpush1.msra.mxu0 %v130
  %198 = vmatprep.subr.mxu0 %v133
  %199 = vmatpush1.msra.mxu0 %v132
  %200 = vmatprep.subr.mxu0 %v135
  %201 = vmatpush1.msra.mxu0 %v134
  %202 = vmatprep.subr.mxu0 %v137
  %203 = vmatpush1.msra.mxu0 %v136
  %204 = vmatprep.subr.mxu0 %v139
  %205 = vmatpush1.msra.mxu0 %v138
  %206 = vmatprep.subr.mxu0 %v141
  %207 = vmatpush1.msra.mxu0 %v140
  %208 = vmatprep.subr.mxu0 %v143
  %209 = vmatpush1.msra.mxu0 %v142
  %210 = vmatprep.subr.mxu0 %v145
  %211 = vmatpush1.msra.mxu0 %v144
  %212 = vmatprep.subr.mxu0 %v147
  %213 = vmatpush1.msra.mxu0 %v146
  %214 = vmatprep.subr.mxu0 0.0
  %215 = vmatpush1.msra.mxu0 0.0
  %216 = vmatprep.subr.mxu0 0.0
  %217 = vmatpush1.msra.mxu0 0.0
  %218 = vmatprep.subr.mxu0 0.0
  %219 = vmatpush1.msra.mxu0 0.0
  %220 = vmatprep.subr.mxu0 0.0
  %221 = vmatpush1.msra.mxu0 0.0
  %222 = vmatprep.subr.mxu0 0.0
  %223 = vmatpush1.msra.mxu0 0.0
  %224 = vmatprep.subr.mxu0 0.0
  %225 = vmatpush1.msra.mxu0 0.0
  %226 = vmatprep.subr.mxu0 0.0
  %227 = vmatpush1.msra.mxu0 0.0
  %228 = vmatprep.subr.mxu0 0.0
  %229 = vmatpush1.msra.mxu0 0.0
  %230 = vmatprep.subr.mxu0 0.0
  %231 = vmatpush1.msra.mxu0 0.0
  %232 = vmatprep.subr.mxu0 0.0
  %233 = vmatpush1.msra.mxu0 0.0
  %234 = vmatprep.subr.mxu0 0.0
  %235 = vmatpush1.msra.mxu0 0.0
  %236 = vmatprep.subr.mxu0 0.0
  %237 = vmatpush1.msra.mxu0 0.0
  %238 = vmatprep.subr.mxu0 0.0
  %239 = vmatpush1.msra.mxu0 0.0
  %240 = vmatprep.subr.mxu0 0.0
  %241 = vmatpush1.msra.mxu0 0.0
  %242 = vmatprep.subr.mxu0 0.0
  %243 = vmatpush1.msra.mxu0 0.0
  %244 = vmatprep.subr.mxu0 0.0
  %245 = vmatpush1.msra.mxu0 0.0
  %246 = vmatprep.subr.mxu0 0.0
  %247 = vmatpush1.msra.mxu0 0.0
  %248 = vmatprep.subr.mxu0 0.0
  %249 = vmatpush1.msra.mxu0 0.0
  %250 = vmatprep.mubr.f32.mxu0 0.0
  %251 = vmatmul.mubr.f32.gmra.mrb[0].mxu0 %v163
  %v252 = vpop.f32.mrb[0].mxu0
  %v253 = vadd.f32 %v154, %v252
  %v254 = vpop.f32.mrb[0].mxu0
  %v255 = vadd.f32 %v158, %v254
  %256 = vmatprep.mubr.f32.mxu0 0.0
  %257 = vmatmul.mubr.f32.gmra.mrb[0].mxu0 %v166
  %v258 = vpop.f32.mrb[0].mxu0
  %v259 = vadd.f32 %v154, %v258
  %v260 = vpop.f32.mrb[0].mxu0
  %v261 = vadd.f32 %v158, %v260
  %262 = vmatprep.mubr.f32.mxu0 0.0
  %263 = vmatmul.mubr.f32.gmra.mrb[0].mxu0 %v169
  %v264 = vpop.f32.mrb[0].mxu0
  %v265 = vadd.f32 %v154, %v264
  %v266 = vpop.f32.mrb[0].mxu0
  %v267 = vadd.f32 %v158, %v266
  %268 = vmatprep.mubr.f32.mxu0 0.0
  %269 = vmatmul.mubr.f32.gmra.mrb[0].mxu0 %v172
  %v270 = vpop.f32.mrb[0].mxu0
  %v271 = vadd.f32 %v154, %v270
  %v272 = vpop.f32.mrb[0].mxu0
  %v273 = vadd.f32 %v158, %v272
  %274 = vmatprep.mubr.f32.mxu0 0.0
  %275 = vmatmul.mubr.f32.gmra.mrb[0].mxu0 %v175
  %v276 = vpop.f32.mrb[0].mxu0
  %v277 = vadd.f32 %v154, %v276
  %v278 = vpop.f32.mrb[0].mxu0
  %v279 = vadd.f32 %v158, %v278
  %280 = vmatprep.mubr.f32.mxu0 0.0
  %281 = vmatmul.mubr.f32.gmra.mrb[0].mxu0 %v178
  %v282 = vpop.f32.mrb[0].mxu0
  %v283 = vadd.f32 %v154, %v282
  %v284 = vpop.f32.mrb[0].mxu0
  %v285 = vadd.f32 %v158, %v284
  %286 = vmatprep.mubr.f32.mxu0 0.0
  %287 = vmatmul.mubr.f32.gmra.mrb[0].mxu0 %v181
  %v288 = vpop.f32.mrb[0].mxu0
  %v289 = vadd.f32 %v154, %v288
  %v290 = vpop.f32.mrb[0].mxu0
  %v291 = vadd.f32 %v158, %v290
  %292 = vmatprep.mubr.f32.mxu0 0.0
  %293 = vmatmul.mubr.f32.gmra.mrb[0].mxu0 %v184
  %v294 = vpop.f32.mrb[0].mxu0
  %v295 = vadd.f32 %v154, %v294
  %v296 = vpop.f32.mrb[0].mxu0
  %v297 = vadd.f32 %v158, %v296
  %298 = vdwg.mxu0
  %v299 = vld [vmem:[%s1 + $0xe0] sm:$0xff]
  %v300 = vld [vmem:[%s1 + $0xe8] sm:$0xff]
  %v301 = vld [vmem:[%s1 + $0xf0] sm:$0xff]
  %v302 = vld [vmem:[%s1 + $0xf8] sm:$0xff]
  %v303 = vld [vmem:[%s1 + $0x100] sm:$0xff]
  %v304 = vld [vmem:[%s1 + $0x108] sm:$0xff]
  %v305 = vld [vmem:[%s1 + $0x110] sm:$0xff]
  %v306 = vld [vmem:[%s1 + $0x118] sm:$0xff]
  %v307 = vld [vmem:[%s1 + $0x120] sm:$0xff]
  %v308 = vld [vmem:[%s1 + $0x128] sm:$0xff]
  %v309 = vld [vmem:[%s1 + $0x130] sm:$0xff]
  %v310 = vld [vmem:[%s1 + $0x138] sm:$0xff]
  %v311 = vld [vmem:[%s1 + $0x140] sm:$0xff]
  %v312 = vld [vmem:[%s1 + $0x148] sm:$0xff]
  %v313 = vld [vmem:[%s1 + $0x150] sm:$0xff]
  %v314 = vld [vmem:[%s1 + $0x158] sm:$0xff]
  %v315 = vld [vmem:[%s2] sm:$0xff]
  %v316 = vld [vmem:[%s2 + $0x8] sm:$0xff]
  %vm317 = vcmask 523264
  %v319 = vsel %vm317, %v315, 0
  %321 = vmatprep.subr.mxu0 %v300
  %322 = vmatpush1.msra.mxu0 %v299
  %323 = vmatprep.subr.mxu0 %v302
  %324 = vmatpush1.msra.mxu0 %v301
  %325 = vmatprep.subr.mxu0 %v304
  %326 = vmatpush1.msra.mxu0 %v303
  %327 = vmatprep.subr.mxu0 %v306
  %328 = vmatpush1.msra.mxu0 %v305
  %329 = vmatprep.subr.mxu0 %v308
  %330 = vmatpush1.msra.mxu0 %v307
  %331 = vmatprep.subr.mxu0 %v310
  %332 = vmatpush1.msra.mxu0 %v309
  %333 = vmatprep.subr.mxu0 %v312
  %334 = vmatpush1.msra.mxu0 %v311
  %335 = vmatprep.subr.mxu0 %v314
  %336 = vmatpush1.msra.mxu0 %v313
  %337 = vmatprep.subr.mxu0 0.0
  %338 = vmatpush1.msra.mxu0 0.0
  %339 = vmatprep.subr.mxu0 0.0
  %340 = vmatpush1.msra.mxu0 0.0
  %341 = vmatprep.subr.mxu0 0.0
  %342 = vmatpush1.msra.mxu0 0.0
  %343 = vmatprep.subr.mxu0 0.0
  %344 = vmatpush1.msra.mxu0 0.0
  %345 = vmatprep.subr.mxu0 0.0
  %346 = vmatpush1.msra.mxu0 0.0
  %347 = vmatprep.subr.mxu0 0.0
  %348 = vmatpush1.msra.mxu0 0.0
  %349 = vmatprep.subr.mxu0 0.0
  %350 = vmatpush1.msra.mxu0 0.0
  %351 = vmatprep.subr.mxu0 0.0
  %352 = vmatpush1.msra.mxu0 0.0
  %353 = vmatprep.subr.mxu0 0.0
  %354 = vmatpush1.msra.mxu0 0.0
  %355 = vmatprep.subr.mxu0 0.0
  %356 = vmatpush1.msra.mxu0 0.0
  %357 = vmatprep.subr.mxu0 0.0
  %358 = vmatpush1.msra.mxu0 0.0
  %359 = vmatprep.subr.mxu0 0.0
  %360 = vmatpush1.msra.mxu0 0.0
  %361 = vmatprep.subr.mxu0 0.0
  %362 = vmatpush1.msra.mxu0 0.0
  %363 = vmatprep.subr.mxu0 0.0
  %364 = vmatpush1.msra.mxu0 0.0
  %365 = vmatprep.subr.mxu0 0.0
  %366 = vmatpush1.msra.mxu0 0.0
  %367 = vmatprep.subr.mxu0 0.0
  %368 = vmatpush1.msra.mxu0 0.0
  %369 = vmatprep.subr.mxu0 0.0
  %370 = vmatpush1.msra.mxu0 0.0
  %371 = vmatprep.subr.mxu0 0.0
  %372 = vmatpush1.msra.mxu0 0.0
  %373 = vmatprep.subr.mxu0 0.0
  %374 = vmatpush1.msra.mxu0 0.0
  %375 = vmatprep.subr.mxu0 0.0
  %376 = vmatpush1.msra.mxu0 0.0
  %377 = vmatprep.subr.mxu0 0.0
  %378 = vmatpush1.msra.mxu0 0.0
  %379 = vmatprep.subr.mxu0 0.0
  %380 = vmatpush1.msra.mxu0 0.0
  %381 = vmatprep.subr.mxu0 0.0
  %382 = vmatpush1.msra.mxu0 0.0
  %383 = vmatprep.subr.mxu0 0.0
  %384 = vmatpush1.msra.mxu0 0.0
  %385 = vmatprep.mubr.f32.mxu0 0.0
  %386 = vmatmul.mubr.f32.gmra.mrb[0].mxu0 %v319
  %v387 = vpop.f32.mrb[0].mxu0
  %v388 = vadd.f32 0.0, %v387
  %v389 = vpop.f32.mrb[0].mxu0
  %v390 = vadd.f32 0.0, %v389
  %391 = vdwg.mxu0
  %v392 = vadd.f32 %v253, %v388
  %v393 = vadd.f32 %v255, %v390
  %v394 = vxor.u32 %v392, 2147483648
  %v395 = vxor.u32 %v393, 2147483648
  %v396 = vmul.f32 %v394, 1.442695
  %v397 = vpow.pop %v396
  %v398 = vmul.f32 %v395, 1.442695
  %v399 = vpow.pop %v398
  %v400 = vadd.f32 %v397, 1.0
  %v401 = vadd.f32 %v399, 1.0
  %v402 = vrcp.pop %v400
  %v403 = vmul.f32 1.0, %v402
  %v404 = vrcp.pop %v401
  %v405 = vmul.f32 1.0, %v404
  %v406 = vtanh.pop %v393
  %408 = vrot.lane.b32.xlu0 %v316, 64
  %v409 = vpop.permute.xlu0 %408
  %v411 = vmul.f32 %v403, %v409
  %413 = vrot.lane.b32.xlu0 %v406, 64
  %v414 = vpop.permute.xlu0 %413
  %v416 = vmul.f32 %v403, %v414
  %418 = vrot.lane.b32.xlu0 %v416, 64
  %v419 = vpop.permute.xlu0 %418
  %v421 = vadd.f32 %v411, %v419
  %v422 = vtanh.pop %v421
  %424 = vrot.lane.b32.xlu0 %v422, 64
  %v425 = vpop.permute.xlu0 %424
  %v427 = vmul.f32 %v405, %v425
  %v429 = vsel %vm317, %v427, 0
  %431 = vmatprep.subr.mxu0 %v300
  %432 = vmatpush1.msra.mxu0 %v299
  %433 = vmatprep.subr.mxu0 %v302
  %434 = vmatpush1.msra.mxu0 %v301
  %435 = vmatprep.subr.mxu0 %v304
  %436 = vmatpush1.msra.mxu0 %v303
  %437 = vmatprep.subr.mxu0 %v306
  %438 = vmatpush1.msra.mxu0 %v305
  %439 = vmatprep.subr.mxu0 %v308
  %440 = vmatpush1.msra.mxu0 %v307
  %441 = vmatprep.subr.mxu0 %v310
  %442 = vmatpush1.msra.mxu0 %v309
  %443 = vmatprep.subr.mxu0 %v312
  %444 = vmatpush1.msra.mxu0 %v311
  %445 = vmatprep.subr.mxu0 %v314
  %446 = vmatpush1.msra.mxu0 %v313
  %447 = vmatprep.subr.mxu0 0.0
  %448 = vmatpush1.msra.mxu0 0.0
  %449 = vmatprep.subr.mxu0 0.0
  %450 = vmatpush1.msra.mxu0 0.0
  %451 = vmatprep.subr.mxu0 0.0
  %452 = vmatpush1.msra.mxu0 0.0
  %453 = vmatprep.subr.mxu0 0.0
  %454 = vmatpush1.msra.mxu0 0.0
  %455 = vmatprep.subr.mxu0 0.0
  %456 = vmatpush1.msra.mxu0 0.0
  %457 = vmatprep.subr.mxu0 0.0
  %458 = vmatpush1.msra.mxu0 0.0
  %459 = vmatprep.subr.mxu0 0.0
  %460 = vmatpush1.msra.mxu0 0.0
  %461 = vmatprep.subr.mxu0 0.0
  %462 = vmatpush1.msra.mxu0 0.0
  %463 = vmatprep.subr.mxu0 0.0
  %464 = vmatpush1.msra.mxu0 0.0
  %465 = vmatprep.subr.mxu0 0.0
  %466 = vmatpush1.msra.mxu0 0.0
  %467 = vmatprep.subr.mxu0 0.0
  %468 = vmatpush1.msra.mxu0 0.0
  %469 = vmatprep.subr.mxu0 0.0
  %470 = vmatpush1.msra.mxu0 0.0
  %471 = vmatprep.subr.mxu0 0.0
  %472 = vmatpush1.msra.mxu0 0.0
  %473 = vmatprep.subr.mxu0 0.0
  %474 = vmatpush1.msra.mxu0 0.0
  %475 = vmatprep.subr.mxu0 0.0
  %476 = vmatpush1.msra.mxu0 0.0
  %477 = vmatprep.subr.mxu0 0.0
  %478 = vmatpush1.msra.mxu0 0.0
  %479 = vmatprep.subr.mxu0 0.0
  %480 = vmatpush1.msra.mxu0 0.0
  %481 = vmatprep.subr.mxu0 0.0
  %482 = vmatpush1.msra.mxu0 0.0
  %483 = vmatprep.subr.mxu0 0.0
  %484 = vmatpush1.msra.mxu0 0.0
  %485 = vmatprep.subr.mxu0 0.0
  %486 = vmatpush1.msra.mxu0 0.0
  %487 = vmatprep.subr.mxu0 0.0
  %488 = vmatpush1.msra.mxu0 0.0
  %489 = vmatprep.subr.mxu0 0.0
  %490 = vmatpush1.msra.mxu0 0.0
  %491 = vmatprep.subr.mxu0 0.0
  %492 = vmatpush1.msra.mxu0 0.0
  %493 = vmatprep.subr.mxu0 0.0
  %494 = vmatpush1.msra.mxu0 0.0
  %495 = vmatprep.mubr.f32.mxu0 0.0
  %496 = vmatmul.mubr.f32.gmra.mrb[0].mxu0 %v429
  %v497 = vpop.f32.mrb[0].mxu0
  %v498 = vadd.f32 0.0, %v497
  %v499 = vpop.f32.mrb[0].mxu0
  %v500 = vadd.f32 0.0, %v499
  %501 = vdwg.mxu0
  %v502 = vadd.f32 %v259, %v498
  %v503 = vadd.f32 %v261, %v500
  %v504 = vxor.u32 %v502, 2147483648
  %v505 = vxor.u32 %v503, 2147483648
  %v506 = vmul.f32 %v504, 1.442695
  %v507 = vpow.pop %v506
  %v508 = vmul.f32 %v505, 1.442695
  %v509 = vpow.pop %v508
  %v510 = vadd.f32 %v507, 1.0
  %v511 = vadd.f32 %v509, 1.0
  %v512 = vrcp.pop %v510
  %v513 = vmul.f32 1.0, %v512
  %v514 = vrcp.pop %v511
  %v515 = vmul.f32 1.0, %v514
  %v516 = vtanh.pop %v503
  %v517 = vmul.f32 %v513, %v421
  %519 = vrot.lane.b32.xlu0 %v516, 64
  %v520 = vpop.permute.xlu0 %519
  %v522 = vmul.f32 %v513, %v520
  %524 = vrot.lane.b32.xlu0 %v522, 64
  %v525 = vpop.permute.xlu0 %524
  %v527 = vadd.f32 %v517, %v525
  %v528 = vtanh.pop %v527
  %530 = vrot.lane.b32.xlu0 %v528, 64
  %v531 = vpop.permute.xlu0 %530
  %v533 = vmul.f32 %v515, %v531
  %v535 = vsel %vm317, %v533, 0
  %537 = vmatprep.subr.mxu0 %v300
  %538 = vmatpush1.msra.mxu0 %v299
  %539 = vmatprep.subr.mxu0 %v302
  %540 = vmatpush1.msra.mxu0 %v301
  %541 = vmatprep.subr.mxu0 %v304
  %542 = vmatpush1.msra.mxu0 %v303
  %543 = vmatprep.subr.mxu0 %v306
  %544 = vmatpush1.msra.mxu0 %v305
  %545 = vmatprep.subr.mxu0 %v308
  %546 = vmatpush1.msra.mxu0 %v307
  %547 = vmatprep.subr.mxu0 %v310
  %548 = vmatpush1.msra.mxu0 %v309
  %549 = vmatprep.subr.mxu0 %v312
  %550 = vmatpush1.msra.mxu0 %v311
  %551 = vmatprep.subr.mxu0 %v314
  %552 = vmatpush1.msra.mxu0 %v313
  %553 = vmatprep.subr.mxu0 0.0
  %554 = vmatpush1.msra.mxu0 0.0
  %555 = vmatprep.subr.mxu0 0.0
  %556 = vmatpush1.msra.mxu0 0.0
  %557 = vmatprep.subr.mxu0 0.0
  %558 = vmatpush1.msra.mxu0 0.0
  %559 = vmatprep.subr.mxu0 0.0
  %560 = vmatpush1.msra.mxu0 0.0
  %561 = vmatprep.subr.mxu0 0.0
  %562 = vmatpush1.msra.mxu0 0.0
  %563 = vmatprep.subr.mxu0 0.0
  %564 = vmatpush1.msra.mxu0 0.0
  %565 = vmatprep.subr.mxu0 0.0
  %566 = vmatpush1.msra.mxu0 0.0
  %567 = vmatprep.subr.mxu0 0.0
  %568 = vmatpush1.msra.mxu0 0.0
  %569 = vmatprep.subr.mxu0 0.0
  %570 = vmatpush1.msra.mxu0 0.0
  %571 = vmatprep.subr.mxu0 0.0
  %572 = vmatpush1.msra.mxu0 0.0
  %573 = vmatprep.subr.mxu0 0.0
  %574 = vmatpush1.msra.mxu0 0.0
  %575 = vmatprep.subr.mxu0 0.0
  %576 = vmatpush1.msra.mxu0 0.0
  %577 = vmatprep.subr.mxu0 0.0
  %578 = vmatpush1.msra.mxu0 0.0
  %579 = vmatprep.subr.mxu0 0.0
  %580 = vmatpush1.msra.mxu0 0.0
  %581 = vmatprep.subr.mxu0 0.0
  %582 = vmatpush1.msra.mxu0 0.0
  %583 = vmatprep.subr.mxu0 0.0
  %584 = vmatpush1.msra.mxu0 0.0
  %585 = vmatprep.subr.mxu0 0.0
  %586 = vmatpush1.msra.mxu0 0.0
  %587 = vmatprep.subr.mxu0 0.0
  %588 = vmatpush1.msra.mxu0 0.0
  %589 = vmatprep.subr.mxu0 0.0
  %590 = vmatpush1.msra.mxu0 0.0
  %591 = vmatprep.subr.mxu0 0.0
  %592 = vmatpush1.msra.mxu0 0.0
  %593 = vmatprep.subr.mxu0 0.0
  %594 = vmatpush1.msra.mxu0 0.0
  %595 = vmatprep.subr.mxu0 0.0
  %596 = vmatpush1.msra.mxu0 0.0
  %597 = vmatprep.subr.mxu0 0.0
  %598 = vmatpush1.msra.mxu0 0.0
  %599 = vmatprep.subr.mxu0 0.0
  %600 = vmatpush1.msra.mxu0 0.0
  %601 = vmatprep.mubr.f32.mxu0 0.0
  %602 = vmatmul.mubr.f32.gmra.mrb[0].mxu0 %v535
  %v603 = vpop.f32.mrb[0].mxu0
  %v604 = vadd.f32 0.0, %v603
  %v605 = vpop.f32.mrb[0].mxu0
  %v606 = vadd.f32 0.0, %v605
  %607 = vdwg.mxu0
  %v608 = vadd.f32 %v265, %v604
  %v609 = vadd.f32 %v267, %v606
  %v610 = vxor.u32 %v608, 2147483648
  %v611 = vxor.u32 %v609, 2147483648
  %v612 = vmul.f32 %v610, 1.442695
  %v613 = vpow.pop %v612
  %v614 = vmul.f32 %v611, 1.442695
  %v615 = vpow.pop %v614
  %v616 = vadd.f32 %v613, 1.0
  %v617 = vadd.f32 %v615, 1.0
  %v618 = vrcp.pop %v616
  %v619 = vmul.f32 1.0, %v618
  %v620 = vrcp.pop %v617
  %v621 = vmul.f32 1.0, %v620
  %v622 = vtanh.pop %v609
  %v623 = vmul.f32 %v619, %v527
  %625 = vrot.lane.b32.xlu0 %v622, 64
  %v626 = vpop.permute.xlu0 %625
  %v628 = vmul.f32 %v619, %v626
  %630 = vrot.lane.b32.xlu0 %v628, 64
  %v631 = vpop.permute.xlu0 %630
  %v633 = vadd.f32 %v623, %v631
  %v634 = vtanh.pop %v633
  %636 = vrot.lane.b32.xlu0 %v634, 64
  %v637 = vpop.permute.xlu0 %636
  %v639 = vmul.f32 %v621, %v637
  %v641 = vsel %vm317, %v639, 0
  %643 = vmatprep.subr.mxu0 %v300
  %644 = vmatpush1.msra.mxu0 %v299
  %645 = vmatprep.subr.mxu0 %v302
  %646 = vmatpush1.msra.mxu0 %v301
  %647 = vmatprep.subr.mxu0 %v304
  %648 = vmatpush1.msra.mxu0 %v303
  %649 = vmatprep.subr.mxu0 %v306
  %650 = vmatpush1.msra.mxu0 %v305
  %651 = vmatprep.subr.mxu0 %v308
  %652 = vmatpush1.msra.mxu0 %v307
  %653 = vmatprep.subr.mxu0 %v310
  %654 = vmatpush1.msra.mxu0 %v309
  %655 = vmatprep.subr.mxu0 %v312
  %656 = vmatpush1.msra.mxu0 %v311
  %657 = vmatprep.subr.mxu0 %v314
  %658 = vmatpush1.msra.mxu0 %v313
  %659 = vmatprep.subr.mxu0 0.0
  %660 = vmatpush1.msra.mxu0 0.0
  %661 = vmatprep.subr.mxu0 0.0
  %662 = vmatpush1.msra.mxu0 0.0
  %663 = vmatprep.subr.mxu0 0.0
  %664 = vmatpush1.msra.mxu0 0.0
  %665 = vmatprep.subr.mxu0 0.0
  %666 = vmatpush1.msra.mxu0 0.0
  %667 = vmatprep.subr.mxu0 0.0
  %668 = vmatpush1.msra.mxu0 0.0
  %669 = vmatprep.subr.mxu0 0.0
  %670 = vmatpush1.msra.mxu0 0.0
  %671 = vmatprep.subr.mxu0 0.0
  %672 = vmatpush1.msra.mxu0 0.0
  %673 = vmatprep.subr.mxu0 0.0
  %674 = vmatpush1.msra.mxu0 0.0
  %675 = vmatprep.subr.mxu0 0.0
  %676 = vmatpush1.msra.mxu0 0.0
  %677 = vmatprep.subr.mxu0 0.0
  %678 = vmatpush1.msra.mxu0 0.0
  %679 = vmatprep.subr.mxu0 0.0
  %680 = vmatpush1.msra.mxu0 0.0
  %681 = vmatprep.subr.mxu0 0.0
  %682 = vmatpush1.msra.mxu0 0.0
  %683 = vmatprep.subr.mxu0 0.0
  %684 = vmatpush1.msra.mxu0 0.0
  %685 = vmatprep.subr.mxu0 0.0
  %686 = vmatpush1.msra.mxu0 0.0
  %687 = vmatprep.subr.mxu0 0.0
  %688 = vmatpush1.msra.mxu0 0.0
  %689 = vmatprep.subr.mxu0 0.0
  %690 = vmatpush1.msra.mxu0 0.0
  %691 = vmatprep.subr.mxu0 0.0
  %692 = vmatpush1.msra.mxu0 0.0
  %693 = vmatprep.subr.mxu0 0.0
  %694 = vmatpush1.msra.mxu0 0.0
  %695 = vmatprep.subr.mxu0 0.0
  %696 = vmatpush1.msra.mxu0 0.0
  %697 = vmatprep.subr.mxu0 0.0
  %698 = vmatpush1.msra.mxu0 0.0
  %699 = vmatprep.subr.mxu0 0.0
  %700 = vmatpush1.msra.mxu0 0.0
  %701 = vmatprep.subr.mxu0 0.0
  %702 = vmatpush1.msra.mxu0 0.0
  %703 = vmatprep.subr.mxu0 0.0
  %704 = vmatpush1.msra.mxu0 0.0
  %705 = vmatprep.subr.mxu0 0.0
  %706 = vmatpush1.msra.mxu0 0.0
  %707 = vmatprep.mubr.f32.mxu0 0.0
  %708 = vmatmul.mubr.f32.gmra.mrb[0].mxu0 %v641
  %v709 = vpop.f32.mrb[0].mxu0
  %v710 = vadd.f32 0.0, %v709
  %v711 = vpop.f32.mrb[0].mxu0
  %v712 = vadd.f32 0.0, %v711
  %713 = vdwg.mxu0
  %v714 = vadd.f32 %v271, %v710
  %v715 = vadd.f32 %v273, %v712
  %v716 = vxor.u32 %v714, 2147483648
  %v717 = vxor.u32 %v715, 2147483648
  %v718 = vmul.f32 %v716, 1.442695
  %v719 = vpow.pop %v718
  %v720 = vmul.f32 %v717, 1.442695
  %v721 = vpow.pop %v720
  %v722 = vadd.f32 %v719, 1.0
  %v723 = vadd.f32 %v721, 1.0
  %v724 = vrcp.pop %v722
  %v725 = vmul.f32 1.0, %v724
  %v726 = vrcp.pop %v723
  %v727 = vmul.f32 1.0, %v726
  %v728 = vtanh.pop %v715
  %v729 = vmul.f32 %v725, %v633
  %731 = vrot.lane.b32.xlu0 %v728, 64
  %v732 = vpop.permute.xlu0 %731
  %v734 = vmul.f32 %v725, %v732
  %736 = vrot.lane.b32.xlu0 %v734, 64
  %v737 = vpop.permute.xlu0 %736
  %v739 = vadd.f32 %v729, %v737
  %v740 = vtanh.pop %v739
  %742 = vrot.lane.b32.xlu0 %v740, 64
  %v743 = vpop.permute.xlu0 %742
  %v745 = vmul.f32 %v727, %v743
  %v747 = vsel %vm317, %v745, 0
  %749 = vmatprep.subr.mxu0 %v300
  %750 = vmatpush1.msra.mxu0 %v299
  %751 = vmatprep.subr.mxu0 %v302
  %752 = vmatpush1.msra.mxu0 %v301
  %753 = vmatprep.subr.mxu0 %v304
  %754 = vmatpush1.msra.mxu0 %v303
  %755 = vmatprep.subr.mxu0 %v306
  %756 = vmatpush1.msra.mxu0 %v305
  %757 = vmatprep.subr.mxu0 %v308
  %758 = vmatpush1.msra.mxu0 %v307
  %759 = vmatprep.subr.mxu0 %v310
  %760 = vmatpush1.msra.mxu0 %v309
  %761 = vmatprep.subr.mxu0 %v312
  %762 = vmatpush1.msra.mxu0 %v311
  %763 = vmatprep.subr.mxu0 %v314
  %764 = vmatpush1.msra.mxu0 %v313
  %765 = vmatprep.subr.mxu0 0.0
  %766 = vmatpush1.msra.mxu0 0.0
  %767 = vmatprep.subr.mxu0 0.0
  %768 = vmatpush1.msra.mxu0 0.0
  %769 = vmatprep.subr.mxu0 0.0
  %770 = vmatpush1.msra.mxu0 0.0
  %771 = vmatprep.subr.mxu0 0.0
  %772 = vmatpush1.msra.mxu0 0.0
  %773 = vmatprep.subr.mxu0 0.0
  %774 = vmatpush1.msra.mxu0 0.0
  %775 = vmatprep.subr.mxu0 0.0
  %776 = vmatpush1.msra.mxu0 0.0
  %777 = vmatprep.subr.mxu0 0.0
  %778 = vmatpush1.msra.mxu0 0.0
  %779 = vmatprep.subr.mxu0 0.0
  %780 = vmatpush1.msra.mxu0 0.0
  %781 = vmatprep.subr.mxu0 0.0
  %782 = vmatpush1.msra.mxu0 0.0
  %783 = vmatprep.subr.mxu0 0.0
  %784 = vmatpush1.msra.mxu0 0.0
  %785 = vmatprep.subr.mxu0 0.0
  %786 = vmatpush1.msra.mxu0 0.0
  %787 = vmatprep.subr.mxu0 0.0
  %788 = vmatpush1.msra.mxu0 0.0
  %789 = vmatprep.subr.mxu0 0.0
  %790 = vmatpush1.msra.mxu0 0.0
  %791 = vmatprep.subr.mxu0 0.0
  %792 = vmatpush1.msra.mxu0 0.0
  %793 = vmatprep.subr.mxu0 0.0
  %794 = vmatpush1.msra.mxu0 0.0
  %795 = vmatprep.subr.mxu0 0.0
  %796 = vmatpush1.msra.mxu0 0.0
  %797 = vmatprep.subr.mxu0 0.0
  %798 = vmatpush1.msra.mxu0 0.0
  %799 = vmatprep.subr.mxu0 0.0
  %800 = vmatpush1.msra.mxu0 0.0
  %801 = vmatprep.subr.mxu0 0.0
  %802 = vmatpush1.msra.mxu0 0.0
  %803 = vmatprep.subr.mxu0 0.0
  %804 = vmatpush1.msra.mxu0 0.0
  %805 = vmatprep.subr.mxu0 0.0
  %806 = vmatpush1.msra.mxu0 0.0
  %807 = vmatprep.subr.mxu0 0.0
  %808 = vmatpush1.msra.mxu0 0.0
  %809 = vmatprep.subr.mxu0 0.0
  %810 = vmatpush1.msra.mxu0 0.0
  %811 = vmatprep.subr.mxu0 0.0
  %812 = vmatpush1.msra.mxu0 0.0
  %813 = vmatprep.mubr.f32.mxu0 0.0
  %814 = vmatmul.mubr.f32.gmra.mrb[0].mxu0 %v747
  %v815 = vpop.f32.mrb[0].mxu0
  %v816 = vadd.f32 0.0, %v815
  %v817 = vpop.f32.mrb[0].mxu0
  %v818 = vadd.f32 0.0, %v817
  %819 = vdwg.mxu0
  %v820 = vadd.f32 %v277, %v816
  %v821 = vadd.f32 %v279, %v818
  %v822 = vxor.u32 %v820, 2147483648
  %v823 = vxor.u32 %v821, 2147483648
  %v824 = vmul.f32 %v822, 1.442695
  %v825 = vpow.pop %v824
  %v826 = vmul.f32 %v823, 1.442695
  %v827 = vpow.pop %v826
  %v828 = vadd.f32 %v825, 1.0
  %v829 = vadd.f32 %v827, 1.0
  %v830 = vrcp.pop %v828
  %v831 = vmul.f32 1.0, %v830
  %v832 = vrcp.pop %v829
  %v833 = vmul.f32 1.0, %v832
  %v834 = vtanh.pop %v821
  %v835 = vmul.f32 %v831, %v739
  %837 = vrot.lane.b32.xlu0 %v834, 64
  %v838 = vpop.permute.xlu0 %837
  %v840 = vmul.f32 %v831, %v838
  %842 = vrot.lane.b32.xlu0 %v840, 64
  %v843 = vpop.permute.xlu0 %842
  %v845 = vadd.f32 %v835, %v843
  %v846 = vtanh.pop %v845
  %848 = vrot.lane.b32.xlu0 %v846, 64
  %v849 = vpop.permute.xlu0 %848
  %v851 = vmul.f32 %v833, %v849
  %v853 = vsel %vm317, %v851, 0
  %855 = vmatprep.subr.mxu0 %v300
  %856 = vmatpush1.msra.mxu0 %v299
  %857 = vmatprep.subr.mxu0 %v302
  %858 = vmatpush1.msra.mxu0 %v301
  %859 = vmatprep.subr.mxu0 %v304
  %860 = vmatpush1.msra.mxu0 %v303
  %861 = vmatprep.subr.mxu0 %v306
  %862 = vmatpush1.msra.mxu0 %v305
  %863 = vmatprep.subr.mxu0 %v308
  %864 = vmatpush1.msra.mxu0 %v307
  %865 = vmatprep.subr.mxu0 %v310
  %866 = vmatpush1.msra.mxu0 %v309
  %867 = vmatprep.subr.mxu0 %v312
  %868 = vmatpush1.msra.mxu0 %v311
  %869 = vmatprep.subr.mxu0 %v314
  %870 = vmatpush1.msra.mxu0 %v313
  %871 = vmatprep.subr.mxu0 0.0
  %872 = vmatpush1.msra.mxu0 0.0
  %873 = vmatprep.subr.mxu0 0.0
  %874 = vmatpush1.msra.mxu0 0.0
  %875 = vmatprep.subr.mxu0 0.0
  %876 = vmatpush1.msra.mxu0 0.0
  %877 = vmatprep.subr.mxu0 0.0
  %878 = vmatpush1.msra.mxu0 0.0
  %879 = vmatprep.subr.mxu0 0.0
  %880 = vmatpush1.msra.mxu0 0.0
  %881 = vmatprep.subr.mxu0 0.0
  %882 = vmatpush1.msra.mxu0 0.0
  %883 = vmatprep.subr.mxu0 0.0
  %884 = vmatpush1.msra.mxu0 0.0
  %885 = vmatprep.subr.mxu0 0.0
  %886 = vmatpush1.msra.mxu0 0.0
  %887 = vmatprep.subr.mxu0 0.0
  %888 = vmatpush1.msra.mxu0 0.0
  %889 = vmatprep.subr.mxu0 0.0
  %890 = vmatpush1.msra.mxu0 0.0
  %891 = vmatprep.subr.mxu0 0.0
  %892 = vmatpush1.msra.mxu0 0.0
  %893 = vmatprep.subr.mxu0 0.0
  %894 = vmatpush1.msra.mxu0 0.0
  %895 = vmatprep.subr.mxu0 0.0
  %896 = vmatpush1.msra.mxu0 0.0
  %897 = vmatprep.subr.mxu0 0.0
  %898 = vmatpush1.msra.mxu0 0.0
  %899 = vmatprep.subr.mxu0 0.0
  %900 = vmatpush1.msra.mxu0 0.0
  %901 = vmatprep.subr.mxu0 0.0
  %902 = vmatpush1.msra.mxu0 0.0
  %903 = vmatprep.subr.mxu0 0.0
  %904 = vmatpush1.msra.mxu0 0.0
  %905 = vmatprep.subr.mxu0 0.0
  %906 = vmatpush1.msra.mxu0 0.0
  %907 = vmatprep.subr.mxu0 0.0
  %908 = vmatpush1.msra.mxu0 0.0
  %909 = vmatprep.subr.mxu0 0.0
  %910 = vmatpush1.msra.mxu0 0.0
  %911 = vmatprep.subr.mxu0 0.0
  %912 = vmatpush1.msra.mxu0 0.0
  %913 = vmatprep.subr.mxu0 0.0
  %914 = vmatpush1.msra.mxu0 0.0
  %915 = vmatprep.subr.mxu0 0.0
  %916 = vmatpush1.msra.mxu0 0.0
  %917 = vmatprep.subr.mxu0 0.0
  %918 = vmatpush1.msra.mxu0 0.0
  %919 = vmatprep.mubr.f32.mxu0 0.0
  %920 = vmatmul.mubr.f32.gmra.mrb[0].mxu0 %v853
  %v921 = vpop.f32.mrb[0].mxu0
  %v922 = vadd.f32 0.0, %v921
  %v923 = vpop.f32.mrb[0].mxu0
  %v924 = vadd.f32 0.0, %v923
  %925 = vdwg.mxu0
  %v926 = vadd.f32 %v283, %v922
  %v927 = vadd.f32 %v285, %v924
  %v928 = vxor.u32 %v926, 2147483648
  %v929 = vxor.u32 %v927, 2147483648
  %v930 = vmul.f32 %v928, 1.442695
  %v931 = vpow.pop %v930
  %v932 = vmul.f32 %v929, 1.442695
  %v933 = vpow.pop %v932
  %v934 = vadd.f32 %v931, 1.0
  %v935 = vadd.f32 %v933, 1.0
  %v936 = vrcp.pop %v934
  %v937 = vmul.f32 1.0, %v936
  %v938 = vrcp.pop %v935
  %v939 = vmul.f32 1.0, %v938
  %v940 = vtanh.pop %v927
  %v941 = vmul.f32 %v937, %v845
  %943 = vrot.lane.b32.xlu0 %v940, 64
  %v944 = vpop.permute.xlu0 %943
  %v946 = vmul.f32 %v937, %v944
  %948 = vrot.lane.b32.xlu0 %v946, 64
  %v949 = vpop.permute.xlu0 %948
  %v951 = vadd.f32 %v941, %v949
  %v952 = vtanh.pop %v951
  %954 = vrot.lane.b32.xlu0 %v952, 64
  %v955 = vpop.permute.xlu0 %954
  %v957 = vmul.f32 %v939, %v955
  %v959 = vsel %vm317, %v957, 0
  %961 = vmatprep.subr.mxu0 %v300
  %962 = vmatpush1.msra.mxu0 %v299
  %963 = vmatprep.subr.mxu0 %v302
  %964 = vmatpush1.msra.mxu0 %v301
  %965 = vmatprep.subr.mxu0 %v304
  %966 = vmatpush1.msra.mxu0 %v303
  %967 = vmatprep.subr.mxu0 %v306
  %968 = vmatpush1.msra.mxu0 %v305
  %969 = vmatprep.subr.mxu0 %v308
  %970 = vmatpush1.msra.mxu0 %v307
  %971 = vmatprep.subr.mxu0 %v310
  %972 = vmatpush1.msra.mxu0 %v309
  %973 = vmatprep.subr.mxu0 %v312
  %974 = vmatpush1.msra.mxu0 %v311
  %975 = vmatprep.subr.mxu0 %v314
  %976 = vmatpush1.msra.mxu0 %v313
  %977 = vmatprep.subr.mxu0 0.0
  %978 = vmatpush1.msra.mxu0 0.0
  %979 = vmatprep.subr.mxu0 0.0
  %980 = vmatpush1.msra.mxu0 0.0
  %981 = vmatprep.subr.mxu0 0.0
  %982 = vmatpush1.msra.mxu0 0.0
  %983 = vmatprep.subr.mxu0 0.0
  %984 = vmatpush1.msra.mxu0 0.0
  %985 = vmatprep.subr.mxu0 0.0
  %986 = vmatpush1.msra.mxu0 0.0
  %987 = vmatprep.subr.mxu0 0.0
  %988 = vmatpush1.msra.mxu0 0.0
  %989 = vmatprep.subr.mxu0 0.0
  %990 = vmatpush1.msra.mxu0 0.0
  %991 = vmatprep.subr.mxu0 0.0
  %992 = vmatpush1.msra.mxu0 0.0
  %993 = vmatprep.subr.mxu0 0.0
  %994 = vmatpush1.msra.mxu0 0.0
  %995 = vmatprep.subr.mxu0 0.0
  %996 = vmatpush1.msra.mxu0 0.0
  %997 = vmatprep.subr.mxu0 0.0
  %998 = vmatpush1.msra.mxu0 0.0
  %999 = vmatprep.subr.mxu0 0.0
  %1000 = vmatpush1.msra.mxu0 0.0
  %1001 = vmatprep.subr.mxu0 0.0
  %1002 = vmatpush1.msra.mxu0 0.0
  %1003 = vmatprep.subr.mxu0 0.0
  %1004 = vmatpush1.msra.mxu0 0.0
  %1005 = vmatprep.subr.mxu0 0.0
  %1006 = vmatpush1.msra.mxu0 0.0
  %1007 = vmatprep.subr.mxu0 0.0
  %1008 = vmatpush1.msra.mxu0 0.0
  %1009 = vmatprep.subr.mxu0 0.0
  %1010 = vmatpush1.msra.mxu0 0.0
  %1011 = vmatprep.subr.mxu0 0.0
  %1012 = vmatpush1.msra.mxu0 0.0
  %1013 = vmatprep.subr.mxu0 0.0
  %1014 = vmatpush1.msra.mxu0 0.0
  %1015 = vmatprep.subr.mxu0 0.0
  %1016 = vmatpush1.msra.mxu0 0.0
  %1017 = vmatprep.subr.mxu0 0.0
  %1018 = vmatpush1.msra.mxu0 0.0
  %1019 = vmatprep.subr.mxu0 0.0
  %1020 = vmatpush1.msra.mxu0 0.0
  %1021 = vmatprep.subr.mxu0 0.0
  %1022 = vmatpush1.msra.mxu0 0.0
  %1023 = vmatprep.subr.mxu0 0.0
  %1024 = vmatpush1.msra.mxu0 0.0
  %1025 = vmatprep.mubr.f32.mxu0 0.0
  %1026 = vmatmul.mubr.f32.gmra.mrb[0].mxu0 %v959
  %v1027 = vpop.f32.mrb[0].mxu0
  %v1028 = vadd.f32 0.0, %v1027
  %v1029 = vpop.f32.mrb[0].mxu0
  %v1030 = vadd.f32 0.0, %v1029
  %1031 = vdwg.mxu0
  %v1032 = vadd.f32 %v289, %v1028
  %v1033 = vadd.f32 %v291, %v1030
  %v1034 = vxor.u32 %v1032, 2147483648
  %v1035 = vxor.u32 %v1033, 2147483648
  %v1036 = vmul.f32 %v1034, 1.442695
  %v1037 = vpow.pop %v1036
  %v1038 = vmul.f32 %v1035, 1.442695
  %v1039 = vpow.pop %v1038
  %v1040 = vadd.f32 %v1037, 1.0
  %v1041 = vadd.f32 %v1039, 1.0
  %v1042 = vrcp.pop %v1040
  %v1043 = vmul.f32 1.0, %v1042
  %v1044 = vrcp.pop %v1041
  %v1045 = vmul.f32 1.0, %v1044
  %v1046 = vtanh.pop %v1033
  %v1047 = vmul.f32 %v1043, %v951
  %1049 = vrot.lane.b32.xlu0 %v1046, 64
  %v1050 = vpop.permute.xlu0 %1049
  %v1052 = vmul.f32 %v1043, %v1050
  %1054 = vrot.lane.b32.xlu0 %v1052, 64
  %v1055 = vpop.permute.xlu0 %1054
  %v1057 = vadd.f32 %v1047, %v1055
  %v1058 = vtanh.pop %v1057
  %1060 = vrot.lane.b32.xlu0 %v1058, 64
  %v1061 = vpop.permute.xlu0 %1060
  %v1063 = vmul.f32 %v1045, %v1061
  %v1065 = vsel %vm317, %v1063, 0
  %1067 = vmatprep.subr.mxu0 %v300
  %1068 = vmatpush1.msra.mxu0 %v299
  %1069 = vmatprep.subr.mxu0 %v302
  %1070 = vmatpush1.msra.mxu0 %v301
  %1071 = vmatprep.subr.mxu0 %v304
  %1072 = vmatpush1.msra.mxu0 %v303
  %1073 = vmatprep.subr.mxu0 %v306
  %1074 = vmatpush1.msra.mxu0 %v305
  %1075 = vmatprep.subr.mxu0 %v308
  %1076 = vmatpush1.msra.mxu0 %v307
  %1077 = vmatprep.subr.mxu0 %v310
  %1078 = vmatpush1.msra.mxu0 %v309
  %1079 = vmatprep.subr.mxu0 %v312
  %1080 = vmatpush1.msra.mxu0 %v311
  %1081 = vmatprep.subr.mxu0 %v314
  %1082 = vmatpush1.msra.mxu0 %v313
  %1083 = vmatprep.subr.mxu0 0.0
  %1084 = vmatpush1.msra.mxu0 0.0
  %1085 = vmatprep.subr.mxu0 0.0
  %1086 = vmatpush1.msra.mxu0 0.0
  %1087 = vmatprep.subr.mxu0 0.0
  %1088 = vmatpush1.msra.mxu0 0.0
  %1089 = vmatprep.subr.mxu0 0.0
  %1090 = vmatpush1.msra.mxu0 0.0
  %1091 = vmatprep.subr.mxu0 0.0
  %1092 = vmatpush1.msra.mxu0 0.0
  %1093 = vmatprep.subr.mxu0 0.0
  %1094 = vmatpush1.msra.mxu0 0.0
  %1095 = vmatprep.subr.mxu0 0.0
  %1096 = vmatpush1.msra.mxu0 0.0
  %1097 = vmatprep.subr.mxu0 0.0
  %1098 = vmatpush1.msra.mxu0 0.0
  %1099 = vmatprep.subr.mxu0 0.0
  %1100 = vmatpush1.msra.mxu0 0.0
  %1101 = vmatprep.subr.mxu0 0.0
  %1102 = vmatpush1.msra.mxu0 0.0
  %1103 = vmatprep.subr.mxu0 0.0
  %1104 = vmatpush1.msra.mxu0 0.0
  %1105 = vmatprep.subr.mxu0 0.0
  %1106 = vmatpush1.msra.mxu0 0.0
  %1107 = vmatprep.subr.mxu0 0.0
  %1108 = vmatpush1.msra.mxu0 0.0
  %1109 = vmatprep.subr.mxu0 0.0
  %1110 = vmatpush1.msra.mxu0 0.0
  %1111 = vmatprep.subr.mxu0 0.0
  %1112 = vmatpush1.msra.mxu0 0.0
  %1113 = vmatprep.subr.mxu0 0.0
  %1114 = vmatpush1.msra.mxu0 0.0
  %1115 = vmatprep.subr.mxu0 0.0
  %1116 = vmatpush1.msra.mxu0 0.0
  %1117 = vmatprep.subr.mxu0 0.0
  %1118 = vmatpush1.msra.mxu0 0.0
  %1119 = vmatprep.subr.mxu0 0.0
  %1120 = vmatpush1.msra.mxu0 0.0
  %1121 = vmatprep.subr.mxu0 0.0
  %1122 = vmatpush1.msra.mxu0 0.0
  %1123 = vmatprep.subr.mxu0 0.0
  %1124 = vmatpush1.msra.mxu0 0.0
  %1125 = vmatprep.subr.mxu0 0.0
  %1126 = vmatpush1.msra.mxu0 0.0
  %1127 = vmatprep.subr.mxu0 0.0
  %1128 = vmatpush1.msra.mxu0 0.0
  %1129 = vmatprep.subr.mxu0 0.0
  %1130 = vmatpush1.msra.mxu0 0.0
  %1131 = vmatprep.mubr.f32.mxu0 0.0
  %1132 = vmatmul.mubr.f32.gmra.mrb[0].mxu0 %v1065
  %v1133 = vpop.f32.mrb[0].mxu0
  %v1134 = vadd.f32 0.0, %v1133
  %v1135 = vpop.f32.mrb[0].mxu0
  %v1136 = vadd.f32 0.0, %v1135
  %1137 = vdwg.mxu0
  %v1138 = vadd.f32 %v295, %v1134
  %v1139 = vadd.f32 %v297, %v1136
  %v1140 = vxor.u32 %v1138, 2147483648
  %v1141 = vxor.u32 %v1139, 2147483648
  %v1142 = vmul.f32 %v1140, 1.442695
  %v1143 = vpow.pop %v1142
  %v1144 = vmul.f32 %v1141, 1.442695
  %v1145 = vpow.pop %v1144
  %v1146 = vadd.f32 %v1143, 1.0
  %v1147 = vadd.f32 %v1145, 1.0
  %v1148 = vrcp.pop %v1146
  %v1149 = vmul.f32 1.0, %v1148
  %v1150 = vrcp.pop %v1147
  %v1151 = vmul.f32 1.0, %v1150
  %v1152 = vtanh.pop %v1139
  %v1153 = vmul.f32 %v1149, %v1057
  %1155 = vrot.lane.b32.xlu0 %v1152, 64
  %v1156 = vpop.permute.xlu0 %1155
  %v1158 = vmul.f32 %v1149, %v1156
  %1160 = vrot.lane.b32.xlu0 %v1158, 64
  %v1161 = vpop.permute.xlu0 %1160
  %v1163 = vadd.f32 %v1153, %v1161
  %v1164 = vtanh.pop %v1163
  %1166 = vrot.lane.b32.xlu0 %v1164, 64
  %v1167 = vpop.permute.xlu0 %1166
  %v1169 = vmul.f32 %v1151, %v1167
  %vm1170 = vcmask 261120
  %v1171 = vsel %vm1170, %v427, %v1169
  %v1172 = vsel %vm1170, %v533, %v1063
  %v1173 = vsel %vm1170, %v639, %v957
  %v1174 = vsel %vm1170, %v745, %v851
  %v1175 = vsel %vm1170, %v851, %v745
  %v1176 = vsel %vm1170, %v957, %v639
  %v1177 = vsel %vm1170, %v1063, %v533
  %v1178 = vsel %vm1170, %v1169, %v427
  %v1179 = vld [vmem:[%s2 + $0x10] sm:$0xff]
  %v1180 = vld [vmem:[%s2 + $0x18] sm:$0xff]
  %v1181 = vld [vmem:[%s2 + $0x20] sm:$0xff]
  %v1182 = vld [vmem:[%s2 + $0x28] sm:$0xff]
  %v1183 = vld [vmem:[%s2 + $0x30] sm:$0xff]
  %v1184 = vld [vmem:[%s2 + $0x38] sm:$0xff]
  %v1185 = vld [vmem:[%s2 + $0x40] sm:$0xff]
  %v1186 = vld [vmem:[%s2 + $0x48] sm:$0xff]
  %v1187 = vld [vmem:[%s2 + $0x50] sm:$0x1]
  %v1188 = vld [vmem:[%s2 + $0x58] sm:$0xff]
  %v1189 = vld [vmem:[%s2 + $0x60] sm:$0xff]
  %v1190 = vld [vmem:[%s2 + $0x68] sm:$0xff]
  %v1191 = vld [vmem:[%s2 + $0x70] sm:$0xff]
  %v1192 = vld [vmem:[%s2 + $0x78] sm:$0xff]
  %v1193 = vld [vmem:[%s2 + $0x80] sm:$0xff]
  %v1194 = vld [vmem:[%s2 + $0x88] sm:$0xff]
  %v1195 = vld [vmem:[%s2 + $0x90] sm:$0xff]
  %v1196 = vld [vmem:[%s2 + $0x98] sm:$0x1]
  %v1197 = vlaneseq
  %v1198 = vshrl.u32 %v1197, 7
  %v1199 = vsub.s32 0, %v1198
  %v1200 = vrot.slane %v1187, %v1199
  %v1202 = vsel %vm317, %v1171, 0
  %v1205 = vsel %vm317, %v1172, 0
  %v1208 = vsel %vm317, %v1173, 0
  %v1211 = vsel %vm317, %v1174, 0
  %v1214 = vsel %vm317, %v1175, 0
  %v1217 = vsel %vm317, %v1176, 0
  %v1220 = vsel %vm317, %v1177, 0
  %v1223 = vsel %vm317, %v1178, 0
  %1225 = vmatprep.subr.mxu0 0.0
  %1226 = vmatpush1.msra.mxu0 %v1179
  %1227 = vmatprep.subr.mxu0 0.0
  %1228 = vmatpush1.msra.mxu0 %v1180
  %1229 = vmatprep.subr.mxu0 0.0
  %1230 = vmatpush1.msra.mxu0 %v1181
  %1231 = vmatprep.subr.mxu0 0.0
  %1232 = vmatpush1.msra.mxu0 %v1182
  %1233 = vmatprep.subr.mxu0 0.0
  %1234 = vmatpush1.msra.mxu0 %v1183
  %1235 = vmatprep.subr.mxu0 0.0
  %1236 = vmatpush1.msra.mxu0 %v1184
  %1237 = vmatprep.subr.mxu0 0.0
  %1238 = vmatpush1.msra.mxu0 %v1185
  %1239 = vmatprep.subr.mxu0 0.0
  %1240 = vmatpush1.msra.mxu0 %v1186
  %1241 = vmatprep.subr.mxu0 0.0
  %1242 = vmatpush1.msra.mxu0 0.0
  %1243 = vmatprep.subr.mxu0 0.0
  %1244 = vmatpush1.msra.mxu0 0.0
  %1245 = vmatprep.subr.mxu0 0.0
  %1246 = vmatpush1.msra.mxu0 0.0
  %1247 = vmatprep.subr.mxu0 0.0
  %1248 = vmatpush1.msra.mxu0 0.0
  %1249 = vmatprep.subr.mxu0 0.0
  %1250 = vmatpush1.msra.mxu0 0.0
  %1251 = vmatprep.subr.mxu0 0.0
  %1252 = vmatpush1.msra.mxu0 0.0
  %1253 = vmatprep.subr.mxu0 0.0
  %1254 = vmatpush1.msra.mxu0 0.0
  %1255 = vmatprep.subr.mxu0 0.0
  %1256 = vmatpush1.msra.mxu0 0.0
  %1257 = vmatprep.subr.mxu0 0.0
  %1258 = vmatpush1.msra.mxu0 0.0
  %1259 = vmatprep.subr.mxu0 0.0
  %1260 = vmatpush1.msra.mxu0 0.0
  %1261 = vmatprep.subr.mxu0 0.0
  %1262 = vmatpush1.msra.mxu0 0.0
  %1263 = vmatprep.subr.mxu0 0.0
  %1264 = vmatpush1.msra.mxu0 0.0
  %1265 = vmatprep.subr.mxu0 0.0
  %1266 = vmatpush1.msra.mxu0 0.0
  %1267 = vmatprep.subr.mxu0 0.0
  %1268 = vmatpush1.msra.mxu0 0.0
  %1269 = vmatprep.subr.mxu0 0.0
  %1270 = vmatpush1.msra.mxu0 0.0
  %1271 = vmatprep.subr.mxu0 0.0
  %1272 = vmatpush1.msra.mxu0 0.0
  %1273 = vmatprep.subr.mxu0 0.0
  %1274 = vmatpush1.msra.mxu0 0.0
  %1275 = vmatprep.subr.mxu0 0.0
  %1276 = vmatpush1.msra.mxu0 0.0
  %1277 = vmatprep.subr.mxu0 0.0
  %1278 = vmatpush1.msra.mxu0 0.0
  %1279 = vmatprep.subr.mxu0 0.0
  %1280 = vmatpush1.msra.mxu0 0.0
  %1281 = vmatprep.subr.mxu0 0.0
  %1282 = vmatpush1.msra.mxu0 0.0
  %1283 = vmatprep.subr.mxu0 0.0
  %1284 = vmatpush1.msra.mxu0 0.0
  %1285 = vmatprep.subr.mxu0 0.0
  %1286 = vmatpush1.msra.mxu0 0.0
  %1287 = vmatprep.subr.mxu0 0.0
  %1288 = vmatpush1.msra.mxu0 0.0
  %1289 = vmatprep.mubr.f32.mxu0 0.0
  %1290 = vmatmul.mubr.f32.gmra.mrb[0].mxu0 %v1202
  %v1291 = vpop.f32.mrb[0].mxu0
  %v1292 = vadd.f32 %v1200, %v1291
  %v1293 = vpop.f32.mrb[0].mxu0
  %1294 = vmatprep.mubr.f32.mxu0 0.0
  %1295 = vmatmul.mubr.f32.gmra.mrb[0].mxu0 %v1205
  %v1296 = vpop.f32.mrb[0].mxu0
  %v1297 = vadd.f32 %v1200, %v1296
  %v1298 = vpop.f32.mrb[0].mxu0
  %1299 = vmatprep.mubr.f32.mxu0 0.0
  %1300 = vmatmul.mubr.f32.gmra.mrb[0].mxu0 %v1208
  %v1301 = vpop.f32.mrb[0].mxu0
  %v1302 = vadd.f32 %v1200, %v1301
  %v1303 = vpop.f32.mrb[0].mxu0
  %1304 = vmatprep.mubr.f32.mxu0 0.0
  %1305 = vmatmul.mubr.f32.gmra.mrb[0].mxu0 %v1211
  %v1306 = vpop.f32.mrb[0].mxu0
  %v1307 = vadd.f32 %v1200, %v1306
  %v1308 = vpop.f32.mrb[0].mxu0
  %1309 = vmatprep.mubr.f32.mxu0 0.0
  %1310 = vmatmul.mubr.f32.gmra.mrb[0].mxu0 %v1214
  %v1311 = vpop.f32.mrb[0].mxu0
  %v1312 = vadd.f32 %v1200, %v1311
  %v1313 = vpop.f32.mrb[0].mxu0
  %1314 = vmatprep.mubr.f32.mxu0 0.0
  %1315 = vmatmul.mubr.f32.gmra.mrb[0].mxu0 %v1217
  %v1316 = vpop.f32.mrb[0].mxu0
  %v1317 = vadd.f32 %v1200, %v1316
  %v1318 = vpop.f32.mrb[0].mxu0
  %1319 = vmatprep.mubr.f32.mxu0 0.0
  %1320 = vmatmul.mubr.f32.gmra.mrb[0].mxu0 %v1220
  %v1321 = vpop.f32.mrb[0].mxu0
  %v1322 = vadd.f32 %v1200, %v1321
  %v1323 = vpop.f32.mrb[0].mxu0
  %1324 = vmatprep.mubr.f32.mxu0 0.0
  %1325 = vmatmul.mubr.f32.gmra.mrb[0].mxu0 %v1223
  %v1326 = vpop.f32.mrb[0].mxu0
  %v1327 = vadd.f32 %v1200, %v1326
  %v1328 = vpop.f32.mrb[0].mxu0
  %1329 = vdwg.mxu0
  %v1330 = vmax.f32 %v1292, 0.0
  %v1331 = vmax.f32 %v1297, 0.0
  %v1332 = vmax.f32 %v1302, 0.0
  %v1333 = vmax.f32 %v1307, 0.0
  %v1334 = vmax.f32 %v1312, 0.0
  %v1335 = vmax.f32 %v1317, 0.0
  %v1336 = vmax.f32 %v1322, 0.0
  %v1337 = vmax.f32 %v1327, 0.0
  %v1338 = vlaneseq
  %v1339 = vshrl.u32 %v1338, 7
  %v1340 = vsub.s32 0, %v1339
  %v1341 = vrot.slane %v1196, %v1340
  %v1343 = vsel %vm317, %v1330, 0
  %1345 = vmatprep.subr.mxu0 0.0
  %1346 = vmatpush1.msra.mxu0 %v1188
  %1347 = vmatprep.subr.mxu0 0.0
  %1348 = vmatpush1.msra.mxu0 %v1189
  %1349 = vmatprep.subr.mxu0 0.0
  %1350 = vmatpush1.msra.mxu0 %v1190
  %1351 = vmatprep.subr.mxu0 0.0
  %1352 = vmatpush1.msra.mxu0 %v1191
  %1353 = vmatprep.subr.mxu0 0.0
  %1354 = vmatpush1.msra.mxu0 %v1192
  %1355 = vmatprep.subr.mxu0 0.0
  %1356 = vmatpush1.msra.mxu0 %v1193
  %1357 = vmatprep.subr.mxu0 0.0
  %1358 = vmatpush1.msra.mxu0 %v1194
  %1359 = vmatprep.subr.mxu0 0.0
  %1360 = vmatpush1.msra.mxu0 %v1195
  %1361 = vmatprep.subr.mxu0 0.0
  %1362 = vmatpush1.msra.mxu0 0.0
  %1363 = vmatprep.subr.mxu0 0.0
  %1364 = vmatpush1.msra.mxu0 0.0
  %1365 = vmatprep.subr.mxu0 0.0
  %1366 = vmatpush1.msra.mxu0 0.0
  %1367 = vmatprep.subr.mxu0 0.0
  %1368 = vmatpush1.msra.mxu0 0.0
  %1369 = vmatprep.subr.mxu0 0.0
  %1370 = vmatpush1.msra.mxu0 0.0
  %1371 = vmatprep.subr.mxu0 0.0
  %1372 = vmatpush1.msra.mxu0 0.0
  %1373 = vmatprep.subr.mxu0 0.0
  %1374 = vmatpush1.msra.mxu0 0.0
  %1375 = vmatprep.subr.mxu0 0.0
  %1376 = vmatpush1.msra.mxu0 0.0
  %1377 = vmatprep.subr.mxu0 0.0
  %1378 = vmatpush1.msra.mxu0 0.0
  %1379 = vmatprep.subr.mxu0 0.0
  %1380 = vmatpush1.msra.mxu0 0.0
  %1381 = vmatprep.subr.mxu0 0.0
  %1382 = vmatpush1.msra.mxu0 0.0
  %1383 = vmatprep.subr.mxu0 0.0
  %1384 = vmatpush1.msra.mxu0 0.0
  %1385 = vmatprep.subr.mxu0 0.0
  %1386 = vmatpush1.msra.mxu0 0.0
  %1387 = vmatprep.subr.mxu0 0.0
  %1388 = vmatpush1.msra.mxu0 0.0
  %1389 = vmatprep.subr.mxu0 0.0
  %1390 = vmatpush1.msra.mxu0 0.0
  %1391 = vmatprep.subr.mxu0 0.0
  %1392 = vmatpush1.msra.mxu0 0.0
  %1393 = vmatprep.subr.mxu0 0.0
  %1394 = vmatpush1.msra.mxu0 0.0
  %1395 = vmatprep.subr.mxu0 0.0
  %1396 = vmatpush1.msra.mxu0 0.0
  %1397 = vmatprep.subr.mxu0 0.0
  %1398 = vmatpush1.msra.mxu0 0.0
  %1399 = vmatprep.subr.mxu0 0.0
  %1400 = vmatpush1.msra.mxu0 0.0
  %1401 = vmatprep.subr.mxu0 0.0
  %1402 = vmatpush1.msra.mxu0 0.0
  %1403 = vmatprep.subr.mxu0 0.0
  %1404 = vmatpush1.msra.mxu0 0.0
  %1405 = vmatprep.subr.mxu0 0.0
  %1406 = vmatpush1.msra.mxu0 0.0
  %1407 = vmatprep.subr.mxu0 0.0
  %1408 = vmatpush1.msra.mxu0 0.0
  %1409 = vmatprep.mubr.f32.mxu0 0.0
  %1410 = vmatmul.mubr.f32.gmra.mrb[0].mxu0 %v1343
  %v1411 = vpop.f32.mrb[0].mxu0
  %v1412 = vadd.f32 %v1341, %v1411
  %v1413 = vpop.f32.mrb[0].mxu0
  %1414 = vdwg.mxu0
  %v1416 = vsel %vm317, %v1331, 0
  %1418 = vmatprep.subr.mxu0 0.0
  %1419 = vmatpush1.msra.mxu0 %v1188
  %1420 = vmatprep.subr.mxu0 0.0
  %1421 = vmatpush1.msra.mxu0 %v1189
  %1422 = vmatprep.subr.mxu0 0.0
  %1423 = vmatpush1.msra.mxu0 %v1190
  %1424 = vmatprep.subr.mxu0 0.0
  %1425 = vmatpush1.msra.mxu0 %v1191
  %1426 = vmatprep.subr.mxu0 0.0
  %1427 = vmatpush1.msra.mxu0 %v1192
  %1428 = vmatprep.subr.mxu0 0.0
  %1429 = vmatpush1.msra.mxu0 %v1193
  %1430 = vmatprep.subr.mxu0 0.0
  %1431 = vmatpush1.msra.mxu0 %v1194
  %1432 = vmatprep.subr.mxu0 0.0
  %1433 = vmatpush1.msra.mxu0 %v1195
  %1434 = vmatprep.subr.mxu0 0.0
  %1435 = vmatpush1.msra.mxu0 0.0
  %1436 = vmatprep.subr.mxu0 0.0
  %1437 = vmatpush1.msra.mxu0 0.0
  %1438 = vmatprep.subr.mxu0 0.0
  %1439 = vmatpush1.msra.mxu0 0.0
  %1440 = vmatprep.subr.mxu0 0.0
  %1441 = vmatpush1.msra.mxu0 0.0
  %1442 = vmatprep.subr.mxu0 0.0
  %1443 = vmatpush1.msra.mxu0 0.0
  %1444 = vmatprep.subr.mxu0 0.0
  %1445 = vmatpush1.msra.mxu0 0.0
  %1446 = vmatprep.subr.mxu0 0.0
  %1447 = vmatpush1.msra.mxu0 0.0
  %1448 = vmatprep.subr.mxu0 0.0
  %1449 = vmatpush1.msra.mxu0 0.0
  %1450 = vmatprep.subr.mxu0 0.0
  %1451 = vmatpush1.msra.mxu0 0.0
  %1452 = vmatprep.subr.mxu0 0.0
  %1453 = vmatpush1.msra.mxu0 0.0
  %1454 = vmatprep.subr.mxu0 0.0
  %1455 = vmatpush1.msra.mxu0 0.0
  %1456 = vmatprep.subr.mxu0 0.0
  %1457 = vmatpush1.msra.mxu0 0.0
  %1458 = vmatprep.subr.mxu0 0.0
  %1459 = vmatpush1.msra.mxu0 0.0
  %1460 = vmatprep.subr.mxu0 0.0
  %1461 = vmatpush1.msra.mxu0 0.0
  %1462 = vmatprep.subr.mxu0 0.0
  %1463 = vmatpush1.msra.mxu0 0.0
  %1464 = vmatprep.subr.mxu0 0.0
  %1465 = vmatpush1.msra.mxu0 0.0
  %1466 = vmatprep.subr.mxu0 0.0
  %1467 = vmatpush1.msra.mxu0 0.0
  %1468 = vmatprep.subr.mxu0 0.0
  %1469 = vmatpush1.msra.mxu0 0.0
  %1470 = vmatprep.subr.mxu0 0.0
  %1471 = vmatpush1.msra.mxu0 0.0
  %1472 = vmatprep.subr.mxu0 0.0
  %1473 = vmatpush1.msra.mxu0 0.0
  %1474 = vmatprep.subr.mxu0 0.0
  %1475 = vmatpush1.msra.mxu0 0.0
  %1476 = vmatprep.subr.mxu0 0.0
  %1477 = vmatpush1.msra.mxu0 0.0
  %1478 = vmatprep.subr.mxu0 0.0
  %1479 = vmatpush1.msra.mxu0 0.0
  %1480 = vmatprep.subr.mxu0 0.0
  %1481 = vmatpush1.msra.mxu0 0.0
  %1482 = vmatprep.mubr.f32.mxu0 0.0
  %1483 = vmatmul.mubr.f32.gmra.mrb[0].mxu0 %v1416
  %v1484 = vpop.f32.mrb[0].mxu0
  %v1485 = vadd.f32 %v1341, %v1484
  %v1486 = vpop.f32.mrb[0].mxu0
  %1487 = vdwg.mxu0
  %v1489 = vsel %vm317, %v1332, 0
  %1491 = vmatprep.subr.mxu0 0.0
  %1492 = vmatpush1.msra.mxu0 %v1188
  %1493 = vmatprep.subr.mxu0 0.0
  %1494 = vmatpush1.msra.mxu0 %v1189
  %1495 = vmatprep.subr.mxu0 0.0
  %1496 = vmatpush1.msra.mxu0 %v1190
  %1497 = vmatprep.subr.mxu0 0.0
  %1498 = vmatpush1.msra.mxu0 %v1191
  %1499 = vmatprep.subr.mxu0 0.0
  %1500 = vmatpush1.msra.mxu0 %v1192
  %1501 = vmatprep.subr.mxu0 0.0
  %1502 = vmatpush1.msra.mxu0 %v1193
  %1503 = vmatprep.subr.mxu0 0.0
  %1504 = vmatpush1.msra.mxu0 %v1194
  %1505 = vmatprep.subr.mxu0 0.0
  %1506 = vmatpush1.msra.mxu0 %v1195
  %1507 = vmatprep.subr.mxu0 0.0
  %1508 = vmatpush1.msra.mxu0 0.0
  %1509 = vmatprep.subr.mxu0 0.0
  %1510 = vmatpush1.msra.mxu0 0.0
  %1511 = vmatprep.subr.mxu0 0.0
  %1512 = vmatpush1.msra.mxu0 0.0
  %1513 = vmatprep.subr.mxu0 0.0
  %1514 = vmatpush1.msra.mxu0 0.0
  %1515 = vmatprep.subr.mxu0 0.0
  %1516 = vmatpush1.msra.mxu0 0.0
  %1517 = vmatprep.subr.mxu0 0.0
  %1518 = vmatpush1.msra.mxu0 0.0
  %1519 = vmatprep.subr.mxu0 0.0
  %1520 = vmatpush1.msra.mxu0 0.0
  %1521 = vmatprep.subr.mxu0 0.0
  %1522 = vmatpush1.msra.mxu0 0.0
  %1523 = vmatprep.subr.mxu0 0.0
  %1524 = vmatpush1.msra.mxu0 0.0
  %1525 = vmatprep.subr.mxu0 0.0
  %1526 = vmatpush1.msra.mxu0 0.0
  %1527 = vmatprep.subr.mxu0 0.0
  %1528 = vmatpush1.msra.mxu0 0.0
  %1529 = vmatprep.subr.mxu0 0.0
  %1530 = vmatpush1.msra.mxu0 0.0
  %1531 = vmatprep.subr.mxu0 0.0
  %1532 = vmatpush1.msra.mxu0 0.0
  %1533 = vmatprep.subr.mxu0 0.0
  %1534 = vmatpush1.msra.mxu0 0.0
  %1535 = vmatprep.subr.mxu0 0.0
  %1536 = vmatpush1.msra.mxu0 0.0
  %1537 = vmatprep.subr.mxu0 0.0
  %1538 = vmatpush1.msra.mxu0 0.0
  %1539 = vmatprep.subr.mxu0 0.0
  %1540 = vmatpush1.msra.mxu0 0.0
  %1541 = vmatprep.subr.mxu0 0.0
  %1542 = vmatpush1.msra.mxu0 0.0
  %1543 = vmatprep.subr.mxu0 0.0
  %1544 = vmatpush1.msra.mxu0 0.0
  %1545 = vmatprep.subr.mxu0 0.0
  %1546 = vmatpush1.msra.mxu0 0.0
  %1547 = vmatprep.subr.mxu0 0.0
  %1548 = vmatpush1.msra.mxu0 0.0
  %1549 = vmatprep.subr.mxu0 0.0
  %1550 = vmatpush1.msra.mxu0 0.0
  %1551 = vmatprep.subr.mxu0 0.0
  %1552 = vmatpush1.msra.mxu0 0.0
  %1553 = vmatprep.subr.mxu0 0.0
  %1554 = vmatpush1.msra.mxu0 0.0
  %1555 = vmatprep.mubr.f32.mxu0 0.0
  %1556 = vmatmul.mubr.f32.gmra.mrb[0].mxu0 %v1489
  %v1557 = vpop.f32.mrb[0].mxu0
  %v1558 = vadd.f32 %v1341, %v1557
  %v1559 = vpop.f32.mrb[0].mxu0
  %1560 = vdwg.mxu0
  %v1562 = vsel %vm317, %v1333, 0
  %1564 = vmatprep.subr.mxu0 0.0
  %1565 = vmatpush1.msra.mxu0 %v1188
  %1566 = vmatprep.subr.mxu0 0.0
  %1567 = vmatpush1.msra.mxu0 %v1189
  %1568 = vmatprep.subr.mxu0 0.0
  %1569 = vmatpush1.msra.mxu0 %v1190
  %1570 = vmatprep.subr.mxu0 0.0
  %1571 = vmatpush1.msra.mxu0 %v1191
  %1572 = vmatprep.subr.mxu0 0.0
  %1573 = vmatpush1.msra.mxu0 %v1192
  %1574 = vmatprep.subr.mxu0 0.0
  %1575 = vmatpush1.msra.mxu0 %v1193
  %1576 = vmatprep.subr.mxu0 0.0
  %1577 = vmatpush1.msra.mxu0 %v1194
  %1578 = vmatprep.subr.mxu0 0.0
  %1579 = vmatpush1.msra.mxu0 %v1195
  %1580 = vmatprep.subr.mxu0 0.0
  %1581 = vmatpush1.msra.mxu0 0.0
  %1582 = vmatprep.subr.mxu0 0.0
  %1583 = vmatpush1.msra.mxu0 0.0
  %1584 = vmatprep.subr.mxu0 0.0
  %1585 = vmatpush1.msra.mxu0 0.0
  %1586 = vmatprep.subr.mxu0 0.0
  %1587 = vmatpush1.msra.mxu0 0.0
  %1588 = vmatprep.subr.mxu0 0.0
  %1589 = vmatpush1.msra.mxu0 0.0
  %1590 = vmatprep.subr.mxu0 0.0
  %1591 = vmatpush1.msra.mxu0 0.0
  %1592 = vmatprep.subr.mxu0 0.0
  %1593 = vmatpush1.msra.mxu0 0.0
  %1594 = vmatprep.subr.mxu0 0.0
  %1595 = vmatpush1.msra.mxu0 0.0
  %1596 = vmatprep.subr.mxu0 0.0
  %1597 = vmatpush1.msra.mxu0 0.0
  %1598 = vmatprep.subr.mxu0 0.0
  %1599 = vmatpush1.msra.mxu0 0.0
  %1600 = vmatprep.subr.mxu0 0.0
  %1601 = vmatpush1.msra.mxu0 0.0
  %1602 = vmatprep.subr.mxu0 0.0
  %1603 = vmatpush1.msra.mxu0 0.0
  %1604 = vmatprep.subr.mxu0 0.0
  %1605 = vmatpush1.msra.mxu0 0.0
  %1606 = vmatprep.subr.mxu0 0.0
  %1607 = vmatpush1.msra.mxu0 0.0
  %1608 = vmatprep.subr.mxu0 0.0
  %1609 = vmatpush1.msra.mxu0 0.0
  %1610 = vmatprep.subr.mxu0 0.0
  %1611 = vmatpush1.msra.mxu0 0.0
  %1612 = vmatprep.subr.mxu0 0.0
  %1613 = vmatpush1.msra.mxu0 0.0
  %1614 = vmatprep.subr.mxu0 0.0
  %1615 = vmatpush1.msra.mxu0 0.0
  %1616 = vmatprep.subr.mxu0 0.0
  %1617 = vmatpush1.msra.mxu0 0.0
  %1618 = vmatprep.subr.mxu0 0.0
  %1619 = vmatpush1.msra.mxu0 0.0
  %1620 = vmatprep.subr.mxu0 0.0
  %1621 = vmatpush1.msra.mxu0 0.0
  %1622 = vmatprep.subr.mxu0 0.0
  %1623 = vmatpush1.msra.mxu0 0.0
  %1624 = vmatprep.subr.mxu0 0.0
  %1625 = vmatpush1.msra.mxu0 0.0
  %1626 = vmatprep.subr.mxu0 0.0
  %1627 = vmatpush1.msra.mxu0 0.0
  %1628 = vmatprep.mubr.f32.mxu0 0.0
  %1629 = vmatmul.mubr.f32.gmra.mrb[0].mxu0 %v1562
  %v1630 = vpop.f32.mrb[0].mxu0
  %v1631 = vadd.f32 %v1341, %v1630
  %v1632 = vpop.f32.mrb[0].mxu0
  %1633 = vdwg.mxu0
  %v1635 = vsel %vm317, %v1334, 0
  %1637 = vmatprep.subr.mxu0 0.0
  %1638 = vmatpush1.msra.mxu0 %v1188
  %1639 = vmatprep.subr.mxu0 0.0
  %1640 = vmatpush1.msra.mxu0 %v1189
  %1641 = vmatprep.subr.mxu0 0.0
  %1642 = vmatpush1.msra.mxu0 %v1190
  %1643 = vmatprep.subr.mxu0 0.0
  %1644 = vmatpush1.msra.mxu0 %v1191
  %1645 = vmatprep.subr.mxu0 0.0
  %1646 = vmatpush1.msra.mxu0 %v1192
  %1647 = vmatprep.subr.mxu0 0.0
  %1648 = vmatpush1.msra.mxu0 %v1193
  %1649 = vmatprep.subr.mxu0 0.0
  %1650 = vmatpush1.msra.mxu0 %v1194
  %1651 = vmatprep.subr.mxu0 0.0
  %1652 = vmatpush1.msra.mxu0 %v1195
  %1653 = vmatprep.subr.mxu0 0.0
  %1654 = vmatpush1.msra.mxu0 0.0
  %1655 = vmatprep.subr.mxu0 0.0
  %1656 = vmatpush1.msra.mxu0 0.0
  %1657 = vmatprep.subr.mxu0 0.0
  %1658 = vmatpush1.msra.mxu0 0.0
  %1659 = vmatprep.subr.mxu0 0.0
  %1660 = vmatpush1.msra.mxu0 0.0
  %1661 = vmatprep.subr.mxu0 0.0
  %1662 = vmatpush1.msra.mxu0 0.0
  %1663 = vmatprep.subr.mxu0 0.0
  %1664 = vmatpush1.msra.mxu0 0.0
  %1665 = vmatprep.subr.mxu0 0.0
  %1666 = vmatpush1.msra.mxu0 0.0
  %1667 = vmatprep.subr.mxu0 0.0
  %1668 = vmatpush1.msra.mxu0 0.0
  %1669 = vmatprep.subr.mxu0 0.0
  %1670 = vmatpush1.msra.mxu0 0.0
  %1671 = vmatprep.subr.mxu0 0.0
  %1672 = vmatpush1.msra.mxu0 0.0
  %1673 = vmatprep.subr.mxu0 0.0
  %1674 = vmatpush1.msra.mxu0 0.0
  %1675 = vmatprep.subr.mxu0 0.0
  %1676 = vmatpush1.msra.mxu0 0.0
  %1677 = vmatprep.subr.mxu0 0.0
  %1678 = vmatpush1.msra.mxu0 0.0
  %1679 = vmatprep.subr.mxu0 0.0
  %1680 = vmatpush1.msra.mxu0 0.0
  %1681 = vmatprep.subr.mxu0 0.0
  %1682 = vmatpush1.msra.mxu0 0.0
  %1683 = vmatprep.subr.mxu0 0.0
  %1684 = vmatpush1.msra.mxu0 0.0
  %1685 = vmatprep.subr.mxu0 0.0
  %1686 = vmatpush1.msra.mxu0 0.0
  %1687 = vmatprep.subr.mxu0 0.0
  %1688 = vmatpush1.msra.mxu0 0.0
  %1689 = vmatprep.subr.mxu0 0.0
  %1690 = vmatpush1.msra.mxu0 0.0
  %1691 = vmatprep.subr.mxu0 0.0
  %1692 = vmatpush1.msra.mxu0 0.0
  %1693 = vmatprep.subr.mxu0 0.0
  %1694 = vmatpush1.msra.mxu0 0.0
  %1695 = vmatprep.subr.mxu0 0.0
  %1696 = vmatpush1.msra.mxu0 0.0
  %1697 = vmatprep.subr.mxu0 0.0
  %1698 = vmatpush1.msra.mxu0 0.0
  %1699 = vmatprep.subr.mxu0 0.0
  %1700 = vmatpush1.msra.mxu0 0.0
  %1701 = vmatprep.mubr.f32.mxu0 0.0
  %1702 = vmatmul.mubr.f32.gmra.mrb[0].mxu0 %v1635
  %v1703 = vpop.f32.mrb[0].mxu0
  %v1704 = vadd.f32 %v1341, %v1703
  %v1705 = vpop.f32.mrb[0].mxu0
  %1706 = vdwg.mxu0
  %v1708 = vsel %vm317, %v1335, 0
  %1710 = vmatprep.subr.mxu0 0.0
  %1711 = vmatpush1.msra.mxu0 %v1188
  %1712 = vmatprep.subr.mxu0 0.0
  %1713 = vmatpush1.msra.mxu0 %v1189
  %1714 = vmatprep.subr.mxu0 0.0
  %1715 = vmatpush1.msra.mxu0 %v1190
  %1716 = vmatprep.subr.mxu0 0.0
  %1717 = vmatpush1.msra.mxu0 %v1191
  %1718 = vmatprep.subr.mxu0 0.0
  %1719 = vmatpush1.msra.mxu0 %v1192
  %1720 = vmatprep.subr.mxu0 0.0
  %1721 = vmatpush1.msra.mxu0 %v1193
  %1722 = vmatprep.subr.mxu0 0.0
  %1723 = vmatpush1.msra.mxu0 %v1194
  %1724 = vmatprep.subr.mxu0 0.0
  %1725 = vmatpush1.msra.mxu0 %v1195
  %1726 = vmatprep.subr.mxu0 0.0
  %1727 = vmatpush1.msra.mxu0 0.0
  %1728 = vmatprep.subr.mxu0 0.0
  %1729 = vmatpush1.msra.mxu0 0.0
  %1730 = vmatprep.subr.mxu0 0.0
  %1731 = vmatpush1.msra.mxu0 0.0
  %1732 = vmatprep.subr.mxu0 0.0
  %1733 = vmatpush1.msra.mxu0 0.0
  %1734 = vmatprep.subr.mxu0 0.0
  %1735 = vmatpush1.msra.mxu0 0.0
  %1736 = vmatprep.subr.mxu0 0.0
  %1737 = vmatpush1.msra.mxu0 0.0
  %1738 = vmatprep.subr.mxu0 0.0
  %1739 = vmatpush1.msra.mxu0 0.0
  %1740 = vmatprep.subr.mxu0 0.0
  %1741 = vmatpush1.msra.mxu0 0.0
  %1742 = vmatprep.subr.mxu0 0.0
  %1743 = vmatpush1.msra.mxu0 0.0
  %1744 = vmatprep.subr.mxu0 0.0
  %1745 = vmatpush1.msra.mxu0 0.0
  %1746 = vmatprep.subr.mxu0 0.0
  %1747 = vmatpush1.msra.mxu0 0.0
  %1748 = vmatprep.subr.mxu0 0.0
  %1749 = vmatpush1.msra.mxu0 0.0
  %1750 = vmatprep.subr.mxu0 0.0
  %1751 = vmatpush1.msra.mxu0 0.0
  %1752 = vmatprep.subr.mxu0 0.0
  %1753 = vmatpush1.msra.mxu0 0.0
  %1754 = vmatprep.subr.mxu0 0.0
  %1755 = vmatpush1.msra.mxu0 0.0
  %1756 = vmatprep.subr.mxu0 0.0
  %1757 = vmatpush1.msra.mxu0 0.0
  %1758 = vmatprep.subr.mxu0 0.0
  %1759 = vmatpush1.msra.mxu0 0.0
  %1760 = vmatprep.subr.mxu0 0.0
  %1761 = vmatpush1.msra.mxu0 0.0
  %1762 = vmatprep.subr.mxu0 0.0
  %1763 = vmatpush1.msra.mxu0 0.0
  %1764 = vmatprep.subr.mxu0 0.0
  %1765 = vmatpush1.msra.mxu0 0.0
  %1766 = vmatprep.subr.mxu0 0.0
  %1767 = vmatpush1.msra.mxu0 0.0
  %1768 = vmatprep.subr.mxu0 0.0
  %1769 = vmatpush1.msra.mxu0 0.0
  %1770 = vmatprep.subr.mxu0 0.0
  %1771 = vmatpush1.msra.mxu0 0.0
  %1772 = vmatprep.subr.mxu0 0.0
  %1773 = vmatpush1.msra.mxu0 0.0
  %1774 = vmatprep.mubr.f32.mxu0 0.0
  %1775 = vmatmul.mubr.f32.gmra.mrb[0].mxu0 %v1708
  %v1776 = vpop.f32.mrb[0].mxu0
  %v1777 = vadd.f32 %v1341, %v1776
  %v1778 = vpop.f32.mrb[0].mxu0
  %1779 = vdwg.mxu0
  %v1781 = vsel %vm317, %v1336, 0
  %1783 = vmatprep.subr.mxu0 0.0
  %1784 = vmatpush1.msra.mxu0 %v1188
  %1785 = vmatprep.subr.mxu0 0.0
  %1786 = vmatpush1.msra.mxu0 %v1189
  %1787 = vmatprep.subr.mxu0 0.0
  %1788 = vmatpush1.msra.mxu0 %v1190
  %1789 = vmatprep.subr.mxu0 0.0
  %1790 = vmatpush1.msra.mxu0 %v1191
  %1791 = vmatprep.subr.mxu0 0.0
  %1792 = vmatpush1.msra.mxu0 %v1192
  %1793 = vmatprep.subr.mxu0 0.0
  %1794 = vmatpush1.msra.mxu0 %v1193
  %1795 = vmatprep.subr.mxu0 0.0
  %1796 = vmatpush1.msra.mxu0 %v1194
  %1797 = vmatprep.subr.mxu0 0.0
  %1798 = vmatpush1.msra.mxu0 %v1195
  %1799 = vmatprep.subr.mxu0 0.0
  %1800 = vmatpush1.msra.mxu0 0.0
  %1801 = vmatprep.subr.mxu0 0.0
  %1802 = vmatpush1.msra.mxu0 0.0
  %1803 = vmatprep.subr.mxu0 0.0
  %1804 = vmatpush1.msra.mxu0 0.0
  %1805 = vmatprep.subr.mxu0 0.0
  %1806 = vmatpush1.msra.mxu0 0.0
  %1807 = vmatprep.subr.mxu0 0.0
  %1808 = vmatpush1.msra.mxu0 0.0
  %1809 = vmatprep.subr.mxu0 0.0
  %1810 = vmatpush1.msra.mxu0 0.0
  %1811 = vmatprep.subr.mxu0 0.0
  %1812 = vmatpush1.msra.mxu0 0.0
  %1813 = vmatprep.subr.mxu0 0.0
  %1814 = vmatpush1.msra.mxu0 0.0
  %1815 = vmatprep.subr.mxu0 0.0
  %1816 = vmatpush1.msra.mxu0 0.0
  %1817 = vmatprep.subr.mxu0 0.0
  %1818 = vmatpush1.msra.mxu0 0.0
  %1819 = vmatprep.subr.mxu0 0.0
  %1820 = vmatpush1.msra.mxu0 0.0
  %1821 = vmatprep.subr.mxu0 0.0
  %1822 = vmatpush1.msra.mxu0 0.0
  %1823 = vmatprep.subr.mxu0 0.0
  %1824 = vmatpush1.msra.mxu0 0.0
  %1825 = vmatprep.subr.mxu0 0.0
  %1826 = vmatpush1.msra.mxu0 0.0
  %1827 = vmatprep.subr.mxu0 0.0
  %1828 = vmatpush1.msra.mxu0 0.0
  %1829 = vmatprep.subr.mxu0 0.0
  %1830 = vmatpush1.msra.mxu0 0.0
  %1831 = vmatprep.subr.mxu0 0.0
  %1832 = vmatpush1.msra.mxu0 0.0
  %1833 = vmatprep.subr.mxu0 0.0
  %1834 = vmatpush1.msra.mxu0 0.0
  %1835 = vmatprep.subr.mxu0 0.0
  %1836 = vmatpush1.msra.mxu0 0.0
  %1837 = vmatprep.subr.mxu0 0.0
  %1838 = vmatpush1.msra.mxu0 0.0
  %1839 = vmatprep.subr.mxu0 0.0
  %1840 = vmatpush1.msra.mxu0 0.0
  %1841 = vmatprep.subr.mxu0 0.0
  %1842 = vmatpush1.msra.mxu0 0.0
  %1843 = vmatprep.subr.mxu0 0.0
  %1844 = vmatpush1.msra.mxu0 0.0
  %1845 = vmatprep.subr.mxu0 0.0
  %1846 = vmatpush1.msra.mxu0 0.0
  %1847 = vmatprep.mubr.f32.mxu0 0.0
  %1848 = vmatmul.mubr.f32.gmra.mrb[0].mxu0 %v1781
  %v1849 = vpop.f32.mrb[0].mxu0
  %v1850 = vadd.f32 %v1341, %v1849
  %v1851 = vpop.f32.mrb[0].mxu0
  %1852 = vdwg.mxu0
  %v1854 = vsel %vm317, %v1337, 0
  %1856 = vmatprep.subr.mxu0 0.0
  %1857 = vmatpush1.msra.mxu0 %v1188
  %1858 = vmatprep.subr.mxu0 0.0
  %1859 = vmatpush1.msra.mxu0 %v1189
  %1860 = vmatprep.subr.mxu0 0.0
  %1861 = vmatpush1.msra.mxu0 %v1190
  %1862 = vmatprep.subr.mxu0 0.0
  %1863 = vmatpush1.msra.mxu0 %v1191
  %1864 = vmatprep.subr.mxu0 0.0
  %1865 = vmatpush1.msra.mxu0 %v1192
  %1866 = vmatprep.subr.mxu0 0.0
  %1867 = vmatpush1.msra.mxu0 %v1193
  %1868 = vmatprep.subr.mxu0 0.0
  %1869 = vmatpush1.msra.mxu0 %v1194
  %1870 = vmatprep.subr.mxu0 0.0
  %1871 = vmatpush1.msra.mxu0 %v1195
  %1872 = vmatprep.subr.mxu0 0.0
  %1873 = vmatpush1.msra.mxu0 0.0
  %1874 = vmatprep.subr.mxu0 0.0
  %1875 = vmatpush1.msra.mxu0 0.0
  %1876 = vmatprep.subr.mxu0 0.0
  %1877 = vmatpush1.msra.mxu0 0.0
  %1878 = vmatprep.subr.mxu0 0.0
  %1879 = vmatpush1.msra.mxu0 0.0
  %1880 = vmatprep.subr.mxu0 0.0
  %1881 = vmatpush1.msra.mxu0 0.0
  %1882 = vmatprep.subr.mxu0 0.0
  %1883 = vmatpush1.msra.mxu0 0.0
  %1884 = vmatprep.subr.mxu0 0.0
  %1885 = vmatpush1.msra.mxu0 0.0
  %1886 = vmatprep.subr.mxu0 0.0
  %1887 = vmatpush1.msra.mxu0 0.0
  %1888 = vmatprep.subr.mxu0 0.0
  %1889 = vmatpush1.msra.mxu0 0.0
  %1890 = vmatprep.subr.mxu0 0.0
  %1891 = vmatpush1.msra.mxu0 0.0
  %1892 = vmatprep.subr.mxu0 0.0
  %1893 = vmatpush1.msra.mxu0 0.0
  %1894 = vmatprep.subr.mxu0 0.0
  %1895 = vmatpush1.msra.mxu0 0.0
  %1896 = vmatprep.subr.mxu0 0.0
  %1897 = vmatpush1.msra.mxu0 0.0
  %1898 = vmatprep.subr.mxu0 0.0
  %1899 = vmatpush1.msra.mxu0 0.0
  %1900 = vmatprep.subr.mxu0 0.0
  %1901 = vmatpush1.msra.mxu0 0.0
  %1902 = vmatprep.subr.mxu0 0.0
  %1903 = vmatpush1.msra.mxu0 0.0
  %1904 = vmatprep.subr.mxu0 0.0
  %1905 = vmatpush1.msra.mxu0 0.0
  %1906 = vmatprep.subr.mxu0 0.0
  %1907 = vmatpush1.msra.mxu0 0.0
  %1908 = vmatprep.subr.mxu0 0.0
  %1909 = vmatpush1.msra.mxu0 0.0
  %1910 = vmatprep.subr.mxu0 0.0
  %1911 = vmatpush1.msra.mxu0 0.0
  %1912 = vmatprep.subr.mxu0 0.0
  %1913 = vmatpush1.msra.mxu0 0.0
  %1914 = vmatprep.subr.mxu0 0.0
  %1915 = vmatpush1.msra.mxu0 0.0
  %1916 = vmatprep.subr.mxu0 0.0
  %1917 = vmatpush1.msra.mxu0 0.0
  %1918 = vmatprep.subr.mxu0 0.0
  %1919 = vmatpush1.msra.mxu0 0.0
  %1920 = vmatprep.mubr.f32.mxu0 0.0
  %1921 = vmatmul.mubr.f32.gmra.mrb[0].mxu0 %v1854
  %v1922 = vpop.f32.mrb[0].mxu0
  %v1923 = vadd.f32 %v1341, %v1922
  %v1924 = vpop.f32.mrb[0].mxu0
  %1925 = vdwg.mxu0
  %1927 = vrot.lane.b32.xlu0 %v1485, 4
  %v1928 = vpop.permute.xlu0 %1927
  %1931 = vrot.lane.b32.xlu0 %v1558, 8
  %v1932 = vpop.permute.xlu0 %1931
  %1935 = vrot.lane.b32.xlu0 %v1631, 12
  %v1936 = vpop.permute.xlu0 %1935
  %1939 = vrot.lane.b32.xlu0 %v1704, 16
  %v1940 = vpop.permute.xlu0 %1939
  %1943 = vrot.lane.b32.xlu0 %v1777, 20
  %v1944 = vpop.permute.xlu0 %1943
  %1947 = vrot.lane.b32.xlu0 %v1850, 24
  %v1948 = vpop.permute.xlu0 %1947
  %1951 = vrot.lane.b32.xlu0 %v1923, 28
  %v1952 = vpop.permute.xlu0 %1951
  %vm1954 = vcmask 31744
  %v1955 = vsel %vm1954, %v1412, %v1928
  %vm1956 = vcmask 64512
  %v1957 = vsel %vm1956, %v1955, %v1932
  %vm1958 = vcmask 97280
  %v1959 = vsel %vm1958, %v1957, %v1936
  %vm1960 = vcmask 130048
  %v1961 = vsel %vm1960, %v1959, %v1940
  %vm1962 = vcmask 162816
  %v1963 = vsel %vm1962, %v1961, %v1944
  %vm1964 = vcmask 195584
  %v1965 = vsel %vm1964, %v1963, %v1948
  %vm1966 = vcmask 228352
  %v1967 = vsel %vm1966, %v1965, %v1952
  %1968 = vst.msk [vmem:[%s3] sm:$0xff] %vm1170, %v1967
  // Predicated region
  $region14: #{emb_lstm_forward.1} parent=0 // pred_check
    _
  $region15: #{emb_lstm_forward.1} parent=0 // pred_check_branch
    %1970 = sbr.rel (0) target = $region17
  $region16: #{emb_lstm_forward.1} parent=0 // pred_region
    _
  $region17: #{emb_lstm_forward.1} parent=0 // pred_fallthru
    _
  // Predicated region
  $region18: #{emb_lstm_forward.1} parent=0 // pred_check
    _
  $region19: #{emb_lstm_forward.1} parent=0 // pred_check_branch
    %1972 = sbr.rel (0) target = $region21
  $region20: #{emb_lstm_forward.1} parent=0 // pred_region
    _
  $region21: #{emb_lstm_forward.1} parent=0 // pred_fallthru
    _

</llo_original>
